<compile_context>
chip_gen: v7x
topology: tpu7x:2x2x1
jax: 0.10.0
libtpu: 0.0.40
codegen_flags: <defaults>
</compile_context>

<pallas_src>
import functools

import jax
import jax.numpy as jnp
from jax import lax
from jax.experimental import pallas as pl
from jax.experimental.pallas import tpu as pltpu


def pointgencon_kernel(x_ref,
                       w1_ref, b1_ref,
                       w2_ref, b2_ref,
                       w3_ref, b3_ref,
                       w4_ref, b4_ref,
                       o_ref):
    """Fused 4-layer 1x1-conv MLP on one NCW tile of points.

    x_ref : (bt, C0, tn)     input tile (channels on sublanes, points on lanes)
    wk_ref: (Ck_out, Ck_in)  bf16, pre-transposed; BN folded for layers 1..3;
                             w4 zero-padded to 8 output rows
    bk_ref: (Ck_out, 1)      f32 (b4 padded to 8 rows)
    o_ref : (bt, 3, tn)      f32 output tile
    """
    bt = x_ref.shape[0]
    w1, w2, w3, w4 = w1_ref[...], w2_ref[...], w3_ref[...], w4_ref[...]
    b1, b2, b3, b4 = b1_ref[...], b2_ref[...], b3_ref[...], b4_ref[...]

    def one_batch(b, carry):
        x = x_ref[b].astype(jnp.bfloat16)                             # (C0, tn)

        h = jnp.dot(w1, x, preferred_element_type=jnp.float32) + b1
        h = jnp.maximum(h, 0.0).astype(jnp.bfloat16)                  # relu(bn1(conv1))

        h = jnp.dot(w2, h, preferred_element_type=jnp.float32) + b2
        h = jnp.maximum(h, 0.0).astype(jnp.bfloat16)                  # relu(bn2(conv2))

        h = jnp.dot(w3, h, preferred_element_type=jnp.float32) + b3
        h = jnp.maximum(h, 0.0).astype(jnp.bfloat16)                  # relu(bn3(conv3))

        y = jnp.dot(w4, h, preferred_element_type=jnp.float32) + b4   # (8, tn)
        o_ref[b] = jnp.tanh(y[:3, :])                                 # th(conv4), drop pad rows
        return carry

    lax.fori_loop(0, bt, one_batch, 0, unroll=True)


def _fold_bn(w, b, gamma, beta, mean, var, eps=1e-5):
    """Fold inference-mode BatchNorm1d into a preceding 1x1 conv.

    w: (Cin, Cout), b: (Cout,), BN params: (Cout,).
    y = ((x@w + b) - mean) * gamma / sqrt(var + eps) + beta
      =  x @ (w * s) + ((b - mean) * s + beta),  s = gamma / sqrt(var + eps)
    """
    s = gamma / jnp.sqrt(var + eps)
    return w * s[None, :], (b - mean) * s + beta


def _round_up(x, m):
    return -(-x // m) * m


@functools.partial(jax.jit, static_argnames=("tn",))
def pointgencon_forward(x_ncw, params, tn=1024):
    """x_ncw: (B, C0, N) bfloat16 (preferred) or float32, PyTorch NCW layout.

    Returns (B, 3, N) float32. Pass x in bf16 from the producer to halve the
    dominant HBM read — this kernel is memory-bound on v5e/v6e/v7x.
    """
    B, C0, N = x_ncw.shape

    # ---- tiling policy -------------------------------------------------------
    # Big lane tile (amortizes ~0.35 us/step overhead, MXU-friendly multiple of
    # 256), never grossly larger than N.
    tn = max(256, (tn // 256) * 256)
    tn = min(tn, _round_up(max(N, 1), 256))
    # Fold the whole batch into one grid step when the x block stays small
    # (small workloads are step-overhead-bound).
    x_block_bytes = B * C0 * tn * x_ncw.dtype.itemsize
    bt = B if x_block_bytes <= (2 << 20) else 1
    # v7x megacore: when the batch grid axis collapses to 1, keep >= 2 point
    # tiles so both TensorCores get work.
    if bt == B and pl.cdiv(N, tn) < 2 and N > 256:
        tn = max(256, _round_up(pl.cdiv(N, 2), 256))
    grid = (pl.cdiv(B, bt), pl.cdiv(N, tn))

    # ---- parameter prep (plain JAX, tiny & one-time) -------------------------
    w1, b1 = _fold_bn(params["w1"], params["b1"], params["g1"], params["be1"],
                      params["m1"], params["v1"])
    w2, b2 = _fold_bn(params["w2"], params["b2"], params["g2"], params["be2"],
                      params["m2"], params["v2"])
    w3, b3 = _fold_bn(params["w3"], params["b3"], params["g3"], params["be3"],
                      params["m3"], params["v3"])
    w4, b4 = params["w4"], params["b4"]

    # Pre-transpose to (Cout, Cin) so the kernel computes W @ x in NCW layout;
    # cast to bf16 for the MXU. Pad conv4 to 8 output rows (sublane-friendly).
    w1t = w1.T.astype(jnp.bfloat16)                            # (C1, C0)
    w2t = w2.T.astype(jnp.bfloat16)                            # (C2, C1)
    w3t = w3.T.astype(jnp.bfloat16)                            # (C3, C2)
    C1, C2, C3 = w1t.shape[0], w2t.shape[0], w3t.shape[0]
    w4t = jnp.zeros((8, C3), jnp.float32).at[:3].set(w4.T).astype(jnp.bfloat16)
    b1c = b1.reshape(-1, 1)
    b2c = b2.reshape(-1, 1)
    b3c = b3.reshape(-1, 1)
    b4c = jnp.zeros((8, 1), jnp.float32).at[:3, 0].set(b4)

    const = lambda i, j: (0, 0)                                # weights: resident block

    out = pl.pallas_call(
        pointgencon_kernel,
        out_shape=jax.ShapeDtypeStruct((B, 3, N), jnp.float32),
        grid_spec=pltpu.PrefetchScalarGridSpec(
            num_scalar_prefetch=0,
            grid=grid,
            in_specs=[
                pl.BlockSpec((bt, C0, tn), lambda i, j: (i, 0, j)),   # x tile
                pl.BlockSpec((C1, C0), const), pl.BlockSpec((C1, 1), const),
                pl.BlockSpec((C2, C1), const), pl.BlockSpec((C2, 1), const),
                pl.BlockSpec((C3, C2), const), pl.BlockSpec((C3, 1), const),
                pl.BlockSpec((8, C3), const),  pl.BlockSpec((8, 1), const),
            ],
            out_specs=pl.BlockSpec((bt, 3, tn), lambda i, j: (i, 0, j)),
        ),
        compiler_params=pltpu.CompilerParams(
            dimension_semantics=("parallel", "parallel")),
    )(x_ncw,
      w1t, b1c, w2t, b2c, w3t, b3c, w4t, b4c)

    return out


def _reference_forward(x_ncw, params, eps=1e-5):
    """Pure-JAX f32 reference matching the PyTorch forward (BN in eval mode)."""
    x = jnp.transpose(x_ncw.astype(jnp.float32), (0, 2, 1))    # (B, N, C)

    def bn(h, g, b, m, v):
        return (h - m) / jnp.sqrt(v + eps) * g + b

    h = jax.nn.relu(bn(x @ params["w1"] + params["b1"],
                       params["g1"], params["be1"], params["m1"], params["v1"]))
    h = jax.nn.relu(bn(h @ params["w2"] + params["b2"],
                       params["g2"], params["be2"], params["m2"], params["v2"]))
    h = jax.nn.relu(bn(h @ params["w3"] + params["b3"],
                       params["g3"], params["be3"], params["m3"], params["v3"]))
    h = jnp.tanh(h @ params["w4"] + params["b4"])
    return jnp.transpose(h, (0, 2, 1))                         # (B, 3, N)


def _init_params(key, bottleneck=128):
    c0 = bottleneck
    c1, c2, c3 = bottleneck, bottleneck // 2, bottleneck // 4
    ks = jax.random.split(key, 16)
    mk = lambda k, s, scale: (jax.random.normal(k, s, jnp.float32) * scale)
    params = {
        # conv weights stored as (Cin, Cout); PyTorch Conv1d weight (Cout,Cin,1) transposed.
        "w1": mk(ks[0], (c0, c1), 0.05), "b1": mk(ks[1], (c1,), 0.05),
        "w2": mk(ks[2], (c1, c2), 0.05), "b2": mk(ks[3], (c2,), 0.05),
        "w3": mk(ks[4], (c2, c3), 0.05), "b3": mk(ks[5], (c3,), 0.05),
        "w4": mk(ks[6], (c3, 3), 0.05),  "b4": mk(ks[7], (3,), 0.05),
        # BatchNorm1d (eval mode): gamma, beta, running_mean, running_var
        "g1": 1.0 + 0.1 * jax.random.normal(ks[8], (c1,), jnp.float32),
        "be1": mk(ks[9], (c1,), 0.1),
        "m1": mk(ks[10], (c1,), 0.1),
        "v1": 1.0 + 0.1 * jax.nn.softplus(jax.random.normal(ks[11], (c1,), jnp.float32)),
        "g2": 1.0 + 0.1 * jax.random.normal(ks[12], (c2,), jnp.float32),
        "be2": mk(ks[13], (c2,), 0.1),
        "m2": mk(ks[14], (c2,), 0.1),
        "v2": jnp.ones((c2,), jnp.float32),
        "g3": jnp.ones((c3,), jnp.float32),
        "be3": jnp.zeros((c3,), jnp.float32),
        "m3": jnp.zeros((c3,), jnp.float32),
        "v3": jnp.ones((c3,), jnp.float32),
    }
    # TODO(synk): PyTorch BatchNorm1d in train mode uses batch statistics; this
    # kernel implements inference-mode (running-stats) semantics.
    return params


if __name__ == "__main__":
    key = jax.random.PRNGKey(0)
    k_x, k_p = jax.random.split(key)

    bottleneck = 128          # PointGenCon default bottleneck_size
    B, N = 2, 1000            # ragged N: exercises the in-kernel tail handling
    # Producer contract: feed x already in bf16 so the dominant HBM read is
    # half-width (the kernel also accepts f32).
    x = jax.random.normal(k_x, (B, bottleneck, N), jnp.float32).astype(jnp.bfloat16)

    params = _init_params(k_p, bottleneck)

    out = pointgencon_forward(x, params)   # grid = (1, 2): both v7x cores get a tile
    out = jax.block_until_ready(out)
    assert out.shape == (B, 3, N), out.shape

    ref = _reference_forward(x, params)
    err = float(jnp.max(jnp.abs(out - ref)))
    # bf16 MXU path through four layers: tolerance relaxed vs. a pure-f32 version.
    assert jnp.allclose(out, ref, atol=3e-2, rtol=3e-2), err

    print("KERNEL_OK")
</pallas_src>

<mosaic_0001>
module attributes {stable_mosaic.version = 11 : i64} {
  func.func @pointgencon_kernel(%arg0: i32, %arg1: i32, %arg2: memref<2x128x512xbf16, #tpu.memory_space<vmem>>, %arg3: memref<128x128xbf16, #tpu.memory_space<vmem>>, %arg4: memref<128x1xf32, #tpu.memory_space<vmem>>, %arg5: memref<64x128xbf16, #tpu.memory_space<vmem>>, %arg6: memref<64x1xf32, #tpu.memory_space<vmem>>, %arg7: memref<32x64xbf16, #tpu.memory_space<vmem>>, %arg8: memref<32x1xf32, #tpu.memory_space<vmem>>, %arg9: memref<8x32xbf16, #tpu.memory_space<vmem>>, %arg10: memref<8x1xf32, #tpu.memory_space<vmem>>, %arg11: memref<2x3x512xf32, #tpu.memory_space<vmem>>) attributes {dimension_semantics = [#tpu.dimension_semantics<parallel>, #tpu.dimension_semantics<parallel>], iteration_bounds = array<i64: 1, 2>, scalar_prefetch = 0 : i64, scratch_operands = 0 : i64, tpu.core_type = #tpu.core_type<tc>, window_params = [{transform_indices = @transform_0, window_bounds = array<i64: 2, 128, 512>}, {pipeline_mode = #tpu.pipeline_mode<synchronous>, transform_indices = @transform_1, window_bounds = array<i64: 128, 128>}, {pipeline_mode = #tpu.pipeline_mode<synchronous>, transform_indices = @transform_2, window_bounds = array<i64: 128, 1>}, {pipeline_mode = #tpu.pipeline_mode<synchronous>, transform_indices = @transform_3, window_bounds = array<i64: 64, 128>}, {pipeline_mode = #tpu.pipeline_mode<synchronous>, transform_indices = @transform_4, window_bounds = array<i64: 64, 1>}, {pipeline_mode = #tpu.pipeline_mode<synchronous>, transform_indices = @transform_5, window_bounds = array<i64: 32, 64>}, {pipeline_mode = #tpu.pipeline_mode<synchronous>, transform_indices = @transform_6, window_bounds = array<i64: 32, 1>}, {pipeline_mode = #tpu.pipeline_mode<synchronous>, transform_indices = @transform_7, window_bounds = array<i64: 8, 32>}, {pipeline_mode = #tpu.pipeline_mode<synchronous>, transform_indices = @transform_8, window_bounds = array<i64: 8, 1>}, {transform_indices = @transform_9, window_bounds = array<i64: 2, 3, 512>}]} {
    %c0 = arith.constant 0 : index
    %c0_0 = arith.constant 0 : index
    %0 = vector.load %arg3[%c0, %c0_0] : memref<128x128xbf16, #tpu.memory_space<vmem>>, vector<128x128xbf16>
    %c0_1 = arith.constant 0 : index
    %c0_2 = arith.constant 0 : index
    %1 = vector.load %arg5[%c0_1, %c0_2] : memref<64x128xbf16, #tpu.memory_space<vmem>>, vector<64x128xbf16>
    %c0_3 = arith.constant 0 : index
    %c0_4 = arith.constant 0 : index
    %2 = vector.load %arg7[%c0_3, %c0_4] : memref<32x64xbf16, #tpu.memory_space<vmem>>, vector<32x64xbf16>
    %c0_5 = arith.constant 0 : index
    %c0_6 = arith.constant 0 : index
    %3 = vector.load %arg9[%c0_5, %c0_6] : memref<8x32xbf16, #tpu.memory_space<vmem>>, vector<8x32xbf16>
    %c0_7 = arith.constant 0 : index
    %c0_8 = arith.constant 0 : index
    %4 = vector.load %arg4[%c0_7, %c0_8] : memref<128x1xf32, #tpu.memory_space<vmem>>, vector<128x1xf32>
    %c0_9 = arith.constant 0 : index
    %c0_10 = arith.constant 0 : index
    %5 = vector.load %arg6[%c0_9, %c0_10] : memref<64x1xf32, #tpu.memory_space<vmem>>, vector<64x1xf32>
    %c0_11 = arith.constant 0 : index
    %c0_12 = arith.constant 0 : index
    %6 = vector.load %arg8[%c0_11, %c0_12] : memref<32x1xf32, #tpu.memory_space<vmem>>, vector<32x1xf32>
    %c0_13 = arith.constant 0 : index
    %c0_14 = arith.constant 0 : index
    %7 = vector.load %arg10[%c0_13, %c0_14] : memref<8x1xf32, #tpu.memory_space<vmem>>, vector<8x1xf32>
    %c0_i32 = arith.constant 0 : i32
    %8 = arith.index_cast %c0_i32 : i32 to index
    %c0_15 = arith.constant 0 : index
    %c0_16 = arith.constant 0 : index
    %9 = vector.load %arg2[%8, %c0_15, %c0_16] : memref<2x128x512xbf16, #tpu.memory_space<vmem>>, vector<1x128x512xbf16>
    %10 = vector.shape_cast %9 : vector<1x128x512xbf16> to vector<128x512xbf16>
    %cst = arith.constant dense<0.000000e+00> : vector<128x512xf32>
    %11 = tpu.matmul %0, %10, %cst {dimension_numbers = #tpu.dot_dimension_numbers<[1], [0], [0], [1], [0, 0, 1, 1], [], []>} : vector<128x128xbf16>, vector<128x512xbf16>, vector<128x512xf32> -> vector<128x512xf32>
    %12 = vector.broadcast %4 : vector<128x1xf32> to vector<128x512xf32>
    %13 = arith.addf %11, %12 : vector<128x512xf32>
    %cst_17 = arith.constant 0.000000e+00 : f32
    %14 = vector.broadcast %cst_17 : f32 to vector<128x512xf32>
    %15 = arith.maximumf %13, %14 : vector<128x512xf32>
    %16 = arith.truncf %15 : vector<128x512xf32> to vector<128x512xbf16>
    %cst_18 = arith.constant dense<0.000000e+00> : vector<64x512xf32>
    %17 = tpu.matmul %1, %16, %cst_18 {dimension_numbers = #tpu.dot_dimension_numbers<[1], [0], [0], [1], [0, 0, 1, 1], [], []>} : vector<64x128xbf16>, vector<128x512xbf16>, vector<64x512xf32> -> vector<64x512xf32>
    %18 = vector.broadcast %5 : vector<64x1xf32> to vector<64x512xf32>
    %19 = arith.addf %17, %18 : vector<64x512xf32>
    %cst_19 = arith.constant 0.000000e+00 : f32
    %20 = vector.broadcast %cst_19 : f32 to vector<64x512xf32>
    %21 = arith.maximumf %19, %20 : vector<64x512xf32>
    %22 = arith.truncf %21 : vector<64x512xf32> to vector<64x512xbf16>
    %cst_20 = arith.constant dense<0.000000e+00> : vector<32x512xf32>
    %23 = tpu.matmul %2, %22, %cst_20 {dimension_numbers = #tpu.dot_dimension_numbers<[1], [0], [0], [1], [0, 0, 1, 1], [], []>} : vector<32x64xbf16>, vector<64x512xbf16>, vector<32x512xf32> -> vector<32x512xf32>
    %24 = vector.broadcast %6 : vector<32x1xf32> to vector<32x512xf32>
    %25 = arith.addf %23, %24 : vector<32x512xf32>
    %cst_21 = arith.constant 0.000000e+00 : f32
    %26 = vector.broadcast %cst_21 : f32 to vector<32x512xf32>
    %27 = arith.maximumf %25, %26 : vector<32x512xf32>
    %28 = arith.truncf %27 : vector<32x512xf32> to vector<32x512xbf16>
    %cst_22 = arith.constant dense<0.000000e+00> : vector<8x512xf32>
    %29 = tpu.matmul %3, %28, %cst_22 {dimension_numbers = #tpu.dot_dimension_numbers<[1], [0], [0], [1], [0, 0, 1, 1], [], []>} : vector<8x32xbf16>, vector<32x512xbf16>, vector<8x512xf32> -> vector<8x512xf32>
    %30 = vector.broadcast %7 : vector<8x1xf32> to vector<8x512xf32>
    %31 = arith.addf %29, %30 : vector<8x512xf32>
    %32 = vector.extract_strided_slice %31 {offsets = [0, 0], sizes = [3, 512], strides = [1, 1]} : vector<8x512xf32> to vector<3x512xf32>
    %33 = math.tanh %32 : vector<3x512xf32>
    %34 = arith.index_cast %c0_i32 : i32 to index
    %c0_23 = arith.constant 0 : index
    %c0_24 = arith.constant 0 : index
    %35 = vector.load %arg11[%34, %c0_23, %c0_24] : memref<2x3x512xf32, #tpu.memory_space<vmem>>, vector<1x3x512xf32>
    %36 = vector.shape_cast %35 : vector<1x3x512xf32> to vector<3x512xf32>
    %37 = vector.shape_cast %33 : vector<3x512xf32> to vector<1x3x512xf32>
    tpu.vector_store %arg11[%34, %c0_23, %c0_24], %37 {strides = array<i32>} : memref<2x3x512xf32, #tpu.memory_space<vmem>>, vector<1x3x512xf32>,
    %c1_i32 = arith.constant 1 : i32
    %38 = arith.index_cast %c1_i32 : i32 to index
    %c0_25 = arith.constant 0 : index
    %c0_26 = arith.constant 0 : index
    %39 = vector.load %arg2[%38, %c0_25, %c0_26] : memref<2x128x512xbf16, #tpu.memory_space<vmem>>, vector<1x128x512xbf16>
    %40 = vector.shape_cast %39 : vector<1x128x512xbf16> to vector<128x512xbf16>
    %cst_27 = arith.constant dense<0.000000e+00> : vector<128x512xf32>
    %41 = tpu.matmul %0, %40, %cst_27 {dimension_numbers = #tpu.dot_dimension_numbers<[1], [0], [0], [1], [0, 0, 1, 1], [], []>} : vector<128x128xbf16>, vector<128x512xbf16>, vector<128x512xf32> -> vector<128x512xf32>
    %42 = vector.broadcast %4 : vector<128x1xf32> to vector<128x512xf32>
    %43 = arith.addf %41, %42 : vector<128x512xf32>
    %cst_28 = arith.constant 0.000000e+00 : f32
    %44 = vector.broadcast %cst_28 : f32 to vector<128x512xf32>
    %45 = arith.maximumf %43, %44 : vector<128x512xf32>
    %46 = arith.truncf %45 : vector<128x512xf32> to vector<128x512xbf16>
    %cst_29 = arith.constant dense<0.000000e+00> : vector<64x512xf32>
    %47 = tpu.matmul %1, %46, %cst_29 {dimension_numbers = #tpu.dot_dimension_numbers<[1], [0], [0], [1], [0, 0, 1, 1], [], []>} : vector<64x128xbf16>, vector<128x512xbf16>, vector<64x512xf32> -> vector<64x512xf32>
    %48 = vector.broadcast %5 : vector<64x1xf32> to vector<64x512xf32>
    %49 = arith.addf %47, %48 : vector<64x512xf32>
    %cst_30 = arith.constant 0.000000e+00 : f32
    %50 = vector.broadcast %cst_30 : f32 to vector<64x512xf32>
    %51 = arith.maximumf %49, %50 : vector<64x512xf32>
    %52 = arith.truncf %51 : vector<64x512xf32> to vector<64x512xbf16>
    %cst_31 = arith.constant dense<0.000000e+00> : vector<32x512xf32>
    %53 = tpu.matmul %2, %52, %cst_31 {dimension_numbers = #tpu.dot_dimension_numbers<[1], [0], [0], [1], [0, 0, 1, 1], [], []>} : vector<32x64xbf16>, vector<64x512xbf16>, vector<32x512xf32> -> vector<32x512xf32>
    %54 = vector.broadcast %6 : vector<32x1xf32> to vector<32x512xf32>
    %55 = arith.addf %53, %54 : vector<32x512xf32>
    %cst_32 = arith.constant 0.000000e+00 : f32
    %56 = vector.broadcast %cst_32 : f32 to vector<32x512xf32>
    %57 = arith.maximumf %55, %56 : vector<32x512xf32>
    %58 = arith.truncf %57 : vector<32x512xf32> to vector<32x512xbf16>
    %cst_33 = arith.constant dense<0.000000e+00> : vector<8x512xf32>
    %59 = tpu.matmul %3, %58, %cst_33 {dimension_numbers = #tpu.dot_dimension_numbers<[1], [0], [0], [1], [0, 0, 1, 1], [], []>} : vector<8x32xbf16>, vector<32x512xbf16>, vector<8x512xf32> -> vector<8x512xf32>
    %60 = vector.broadcast %7 : vector<8x1xf32> to vector<8x512xf32>
    %61 = arith.addf %59, %60 : vector<8x512xf32>
    %62 = vector.extract_strided_slice %61 {offsets = [0, 0], sizes = [3, 512], strides = [1, 1]} : vector<8x512xf32> to vector<3x512xf32>
    %63 = math.tanh %62 : vector<3x512xf32>
    %64 = arith.index_cast %c1_i32 : i32 to index
    %c0_34 = arith.constant 0 : index
    %c0_35 = arith.constant 0 : index
    %65 = vector.load %arg11[%64, %c0_34, %c0_35] : memref<2x3x512xf32, #tpu.memory_space<vmem>>, vector<1x3x512xf32>
    %66 = vector.shape_cast %65 : vector<1x3x512xf32> to vector<3x512xf32>
    %67 = vector.shape_cast %63 : vector<3x512xf32> to vector<1x3x512xf32>
    tpu.vector_store %arg11[%64, %c0_34, %c0_35], %67 {strides = array<i32>} : memref<2x3x512xf32, #tpu.memory_space<vmem>>, vector<1x3x512xf32>,
    %c2_i32 = arith.constant 2 : i32
    return
  }
  func.func @transform_0(%arg0: i32, %arg1: i32) -> (i32, i32, i32) {
    %c0_i32 = arith.constant 0 : i32
    %c0_i32_0 = arith.constant 0 : i32
    return %arg0, %c0_i32, %arg1 : i32, i32, i32
  }
  func.func @transform_1(%arg0: i32, %arg1: i32) -> (i32, i32) {
    %c0_i32 = arith.constant 0 : i32
    %c0_i32_0 = arith.constant 0 : i32
    %c0_i32_1 = arith.constant 0 : i32
    return %c0_i32, %c0_i32_0 : i32, i32
  }
  func.func @transform_2(%arg0: i32, %arg1: i32) -> (i32, i32) {
    %c0_i32 = arith.constant 0 : i32
    %c0_i32_0 = arith.constant 0 : i32
    %c0_i32_1 = arith.constant 0 : i32
    return %c0_i32, %c0_i32_0 : i32, i32
  }
  func.func @transform_3(%arg0: i32, %arg1: i32) -> (i32, i32) {
    %c0_i32 = arith.constant 0 : i32
    %c0_i32_0 = arith.constant 0 : i32
    %c0_i32_1 = arith.constant 0 : i32
    return %c0_i32, %c0_i32_0 : i32, i32
  }
  func.func @transform_4(%arg0: i32, %arg1: i32) -> (i32, i32) {
    %c0_i32 = arith.constant 0 : i32
    %c0_i32_0 = arith.constant 0 : i32
    %c0_i32_1 = arith.constant 0 : i32
    return %c0_i32, %c0_i32_0 : i32, i32
  }
  func.func @transform_5(%arg0: i32, %arg1: i32) -> (i32, i32) {
    %c0_i32 = arith.constant 0 : i32
    %c0_i32_0 = arith.constant 0 : i32
    %c0_i32_1 = arith.constant 0 : i32
    return %c0_i32, %c0_i32_0 : i32, i32
  }
  func.func @transform_6(%arg0: i32, %arg1: i32) -> (i32, i32) {
    %c0_i32 = arith.constant 0 : i32
    %c0_i32_0 = arith.constant 0 : i32
    %c0_i32_1 = arith.constant 0 : i32
    return %c0_i32, %c0_i32_0 : i32, i32
  }
  func.func @transform_7(%arg0: i32, %arg1: i32) -> (i32, i32) {
    %c0_i32 = arith.constant 0 : i32
    %c0_i32_0 = arith.constant 0 : i32
    %c0_i32_1 = arith.constant 0 : i32
    return %c0_i32, %c0_i32_0 : i32, i32
  }
  func.func @transform_8(%arg0: i32, %arg1: i32) -> (i32, i32) {
    %c0_i32 = arith.constant 0 : i32
    %c0_i32_0 = arith.constant 0 : i32
    %c0_i32_1 = arith.constant 0 : i32
    return %c0_i32, %c0_i32_0 : i32, i32
  }
  func.func @transform_9(%arg0: i32, %arg1: i32) -> (i32, i32, i32) {
    %c0_i32 = arith.constant 0 : i32
    %c0_i32_0 = arith.constant 0 : i32
    return %arg0, %c0_i32, %arg1 : i32, i32, i32
  }
}

</mosaic_0001>

<llo_original>
// kernel: pointgencon_forward.1
$region0: #{pointgencon_forward.1}
  #allocation0 [shape = 'u32[]', space=smem, size = 0x4, offset = 0x4, fixed_abs, tag = 'smem constant byte address 0x4 - core index']
  #allocation1 [shape = 'u32[144,128]{1,0:T(1,128)}', space=vmem, size = 0x12000, scoped, tag = 'internal scratch']
  %s0 = inlined_call_operand.vmem [shape: bf16[2,128,1000], index: 0, kind: input, shape index: {}]
  %s1 = inlined_call_operand.vmem [shape: bf16[128,128], index: 1, kind: input, shape index: {}]
  %s2 = inlined_call_operand.vmem [shape: f32[128,1], index: 2, kind: input, shape index: {}]
  %s3 = inlined_call_operand.vmem [shape: bf16[64,128], index: 3, kind: input, shape index: {}]
  %s4 = inlined_call_operand.vmem [shape: f32[64,1], index: 4, kind: input, shape index: {}]
  %s5 = inlined_call_operand.vmem [shape: bf16[32,64], index: 5, kind: input, shape index: {}]
  %s6 = inlined_call_operand.vmem [shape: f32[32,1], index: 6, kind: input, shape index: {}]
  %s7 = inlined_call_operand.vmem [shape: bf16[8,32], index: 7, kind: input, shape index: {}]
  %s8 = inlined_call_operand.vmem [shape: f32[8,1], index: 8, kind: input, shape index: {}]
  %s9 = inlined_call_operand.vmem [shape: f32[2,3,1000], index: 9, kind: output, shape index: {}]
  %s10 = sld [smem:[#allocation0]]
  $region111: #{pointgencon_forward.1} parent=0
    _
  %s12 = ssub.s32 1, %s10
  %s13 = scalar_select 0, %s12, %s10
  $region1: #{pointgencon_forward.1} parent=0
    #allocation2 [shape = 'u8[524288]{0}', space=vmem, size = 0x80000, scoped, tag = 'input window, operand 0']
    #allocation3 [shape = 'u8[32768]{0}', space=vmem, size = 0x8000, scoped, tag = 'output window, operand 0']
    loop: start=0, step=1, limit=4
    $region2: #{pointgencon_forward.1} parent=1 // loop_pre_header
      _
    $region3: #{pointgencon_forward.1} parent=1 // loop_header
      %s15 = sphi 0, %s19
      %p16 = scmp.ge.s32.totalorder %s15, 4
      %s22 = sphi 0, %s34
      %s23 = sphi 0, %s30
      %s24 = sphi 0, %s22
      %s25 = sphi 0, %s23
      %s26 = sphi 0, %s24
      %s27 = sphi 0, %s25
      %s39 = sphi 0, %s41
      %s42 = sphi 0, %s39
      %s43 = sphi 0, %s42
      %s59 = sphi 0, %s43
      %s63 = sphi 0, %s63
      %s65 = sphi 0, %s63
      %s66 = sphi 0, %s65
      %s80 = sphi 0, %s66
      %s84 = sphi 0, %s84
      %s86 = sphi 0, %s84
      %s87 = sphi 0, %s86
      %s101 = sphi 0, %s87
      %s105 = sphi 0, %s105
      %s107 = sphi 0, %s105
      %s108 = sphi 0, %s107
      %s122 = sphi 0, %s108
      %s126 = sphi 0, %s126
      %s128 = sphi 0, %s126
      %s129 = sphi 0, %s128
      %s143 = sphi 0, %s129
      %s147 = sphi 0, %s147
      %s149 = sphi 0, %s147
      %s150 = sphi 0, %s149
      %s164 = sphi 0, %s150
      %s168 = sphi 0, %s168
      %s170 = sphi 0, %s168
      %s171 = sphi 0, %s170
      %s185 = sphi 0, %s171
      %s189 = sphi 0, %s189
      %s191 = sphi 0, %s189
      %s192 = sphi 0, %s191
      %s206 = sphi 0, %s192
      %s210 = sphi 0, %s210
      %s212 = sphi 0, %s210
      %s213 = sphi 0, %s212
      %s227 = sphi 0, %s213
      %s235 = sphi 0, %s237
      %s238 = sphi 0, %s235
      %s239 = sphi 0, %s238
      %s255 = sphi 0, %s239
    $region4: #{pointgencon_forward.1} parent=1 // loop_header_branch
      %18 = sbr.rel (%p16) target = $region8
    $region5: #{pointgencon_forward.1} parent=1 // loop_body
      %s20 = ssub.s32 %s15, 1
      %s21 = ssub.s32 %s15, 2
      %s28 = sadd.s32 1, %s23
      %p29 = scmp.ge.s32.totalorder %s28, 2
      %s30 = scalar_select %p29, 0, %s28
      %s31 = sadd.s32 1, %s22
      %s32 = scalar_select %p29, %s31, %s22
      %p33 = scmp.ge.s32.totalorder %s32, 1
      %s34 = scalar_select %p33, 0, %s32
      %s35 = ssub.s32 %s22, %s34
      %s36 = ssub.s32 %s23, %s30
      %s37 = sor.u32 %s35, %s36
      %p38 = scmp.eq.s32.totalorder %s37, 0
      %s40 = sadd.s32 %s39, 1
      %s41 = scalar_select %p38, %s39, %s40
      %p44 = pneg %p38
      %p45 = scmp.eq.s32.totalorder %s15, 1
      %p46 = por %p44, %p45
      %p47 = scmp.ne.s32.totalorder %s39, %s42
      %p48 = scmp.eq.s32.totalorder %s15, 0
      %p49 = por %p47, %p48
      %p50 = scmp.ne.s32.totalorder %s39, %s42
      %p51 = scmp.eq.s32.totalorder %s20, 1
      %p52 = por %p50, %p51
      %p53 = scmp.ne.s32.totalorder %s42, %s43
      %p54 = scmp.eq.s32.totalorder %s20, 0
      %p55 = por %p53, %p54
      %p56 = scmp.ne.s32.totalorder %s42, %s43
      %p57 = scmp.eq.s32.totalorder %s21, 1
      %p58 = por %p56, %p57
      %p60 = scmp.ne.s32.totalorder %s43, %s59
      %p61 = scmp.eq.s32.totalorder %s21, 0
      %p62 = por %p60, %p61
      %s64 = sadd.s32 %s63, 1
      %p67 = scmp.eq.s32.totalorder %s15, 1
      %p68 = scmp.ne.s32.totalorder %s63, %s65
      %p69 = scmp.eq.s32.totalorder %s15, 0
      %p70 = por %p68, %p69
      %p71 = scmp.ne.s32.totalorder %s63, %s65
      %p72 = scmp.eq.s32.totalorder %s20, 1
      %p73 = por %p71, %p72
      %p74 = scmp.ne.s32.totalorder %s65, %s66
      %p75 = scmp.eq.s32.totalorder %s20, 0
      %p76 = por %p74, %p75
      %p77 = scmp.ne.s32.totalorder %s65, %s66
      %p78 = scmp.eq.s32.totalorder %s21, 1
      %p79 = por %p77, %p78
      %p81 = scmp.ne.s32.totalorder %s66, %s80
      %p82 = scmp.eq.s32.totalorder %s21, 0
      %p83 = por %p81, %p82
      %s85 = sadd.s32 %s84, 1
      %p88 = scmp.eq.s32.totalorder %s15, 1
      %p89 = scmp.ne.s32.totalorder %s84, %s86
      %p90 = scmp.eq.s32.totalorder %s15, 0
      %p91 = por %p89, %p90
      %p92 = scmp.ne.s32.totalorder %s84, %s86
      %p93 = scmp.eq.s32.totalorder %s20, 1
      %p94 = por %p92, %p93
      %p95 = scmp.ne.s32.totalorder %s86, %s87
      %p96 = scmp.eq.s32.totalorder %s20, 0
      %p97 = por %p95, %p96
      %p98 = scmp.ne.s32.totalorder %s86, %s87
      %p99 = scmp.eq.s32.totalorder %s21, 1
      %p100 = por %p98, %p99
      %p102 = scmp.ne.s32.totalorder %s87, %s101
      %p103 = scmp.eq.s32.totalorder %s21, 0
      %p104 = por %p102, %p103
      %s106 = sadd.s32 %s105, 1
      %p109 = scmp.eq.s32.totalorder %s15, 1
      %p110 = scmp.ne.s32.totalorder %s105, %s107
      %p111 = scmp.eq.s32.totalorder %s15, 0
      %p112 = por %p110, %p111
      %p113 = scmp.ne.s32.totalorder %s105, %s107
      %p114 = scmp.eq.s32.totalorder %s20, 1
      %p115 = por %p113, %p114
      %p116 = scmp.ne.s32.totalorder %s107, %s108
      %p117 = scmp.eq.s32.totalorder %s20, 0
      %p118 = por %p116, %p117
      %p119 = scmp.ne.s32.totalorder %s107, %s108
      %p120 = scmp.eq.s32.totalorder %s21, 1
      %p121 = por %p119, %p120
      %p123 = scmp.ne.s32.totalorder %s108, %s122
      %p124 = scmp.eq.s32.totalorder %s21, 0
      %p125 = por %p123, %p124
      %s127 = sadd.s32 %s126, 1
      %p130 = scmp.eq.s32.totalorder %s15, 1
      %p131 = scmp.ne.s32.totalorder %s126, %s128
      %p132 = scmp.eq.s32.totalorder %s15, 0
      %p133 = por %p131, %p132
      %p134 = scmp.ne.s32.totalorder %s126, %s128
      %p135 = scmp.eq.s32.totalorder %s20, 1
      %p136 = por %p134, %p135
      %p137 = scmp.ne.s32.totalorder %s128, %s129
      %p138 = scmp.eq.s32.totalorder %s20, 0
      %p139 = por %p137, %p138
      %p140 = scmp.ne.s32.totalorder %s128, %s129
      %p141 = scmp.eq.s32.totalorder %s21, 1
      %p142 = por %p140, %p141
      %p144 = scmp.ne.s32.totalorder %s129, %s143
      %p145 = scmp.eq.s32.totalorder %s21, 0
      %p146 = por %p144, %p145
      %s148 = sadd.s32 %s147, 1
      %p151 = scmp.eq.s32.totalorder %s15, 1
      %p152 = scmp.ne.s32.totalorder %s147, %s149
      %p153 = scmp.eq.s32.totalorder %s15, 0
      %p154 = por %p152, %p153
      %p155 = scmp.ne.s32.totalorder %s147, %s149
      %p156 = scmp.eq.s32.totalorder %s20, 1
      %p157 = por %p155, %p156
      %p158 = scmp.ne.s32.totalorder %s149, %s150
      %p159 = scmp.eq.s32.totalorder %s20, 0
      %p160 = por %p158, %p159
      %p161 = scmp.ne.s32.totalorder %s149, %s150
      %p162 = scmp.eq.s32.totalorder %s21, 1
      %p163 = por %p161, %p162
      %p165 = scmp.ne.s32.totalorder %s150, %s164
      %p166 = scmp.eq.s32.totalorder %s21, 0
      %p167 = por %p165, %p166
      %s169 = sadd.s32 %s168, 1
      %p172 = scmp.eq.s32.totalorder %s15, 1
      %p173 = scmp.ne.s32.totalorder %s168, %s170
      %p174 = scmp.eq.s32.totalorder %s15, 0
      %p175 = por %p173, %p174
      %p176 = scmp.ne.s32.totalorder %s168, %s170
      %p177 = scmp.eq.s32.totalorder %s20, 1
      %p178 = por %p176, %p177
      %p179 = scmp.ne.s32.totalorder %s170, %s171
      %p180 = scmp.eq.s32.totalorder %s20, 0
      %p181 = por %p179, %p180
      %p182 = scmp.ne.s32.totalorder %s170, %s171
      %p183 = scmp.eq.s32.totalorder %s21, 1
      %p184 = por %p182, %p183
      %p186 = scmp.ne.s32.totalorder %s171, %s185
      %p187 = scmp.eq.s32.totalorder %s21, 0
      %p188 = por %p186, %p187
      %s190 = sadd.s32 %s189, 1
      %p193 = scmp.eq.s32.totalorder %s15, 1
      %p194 = scmp.ne.s32.totalorder %s189, %s191
      %p195 = scmp.eq.s32.totalorder %s15, 0
      %p196 = por %p194, %p195
      %p197 = scmp.ne.s32.totalorder %s189, %s191
      %p198 = scmp.eq.s32.totalorder %s20, 1
      %p199 = por %p197, %p198
      %p200 = scmp.ne.s32.totalorder %s191, %s192
      %p201 = scmp.eq.s32.totalorder %s20, 0
      %p202 = por %p200, %p201
      %p203 = scmp.ne.s32.totalorder %s191, %s192
      %p204 = scmp.eq.s32.totalorder %s21, 1
      %p205 = por %p203, %p204
      %p207 = scmp.ne.s32.totalorder %s192, %s206
      %p208 = scmp.eq.s32.totalorder %s21, 0
      %p209 = por %p207, %p208
      %s211 = sadd.s32 %s210, 1
      %p214 = scmp.eq.s32.totalorder %s15, 1
      %p215 = scmp.ne.s32.totalorder %s210, %s212
      %p216 = scmp.eq.s32.totalorder %s15, 0
      %p217 = por %p215, %p216
      %p218 = scmp.ne.s32.totalorder %s210, %s212
      %p219 = scmp.eq.s32.totalorder %s20, 1
      %p220 = por %p218, %p219
      %p221 = scmp.ne.s32.totalorder %s212, %s213
      %p222 = scmp.eq.s32.totalorder %s20, 0
      %p223 = por %p221, %p222
      %p224 = scmp.ne.s32.totalorder %s212, %s213
      %p225 = scmp.eq.s32.totalorder %s21, 1
      %p226 = por %p224, %p225
      %p228 = scmp.ne.s32.totalorder %s213, %s227
      %p229 = scmp.eq.s32.totalorder %s21, 0
      %p230 = por %p228, %p229
      %s231 = ssub.s32 %s22, %s34
      %s232 = ssub.s32 %s23, %s30
      %s233 = sor.u32 %s231, %s232
      %p234 = scmp.eq.s32.totalorder %s233, 0
      %s236 = sadd.s32 %s235, 1
      %s237 = scalar_select %p234, %s235, %s236
      %p240 = pneg %p234
      %p241 = scmp.eq.s32.totalorder %s15, 1
      %p242 = por %p240, %p241
      %p243 = scmp.ne.s32.totalorder %s235, %s238
      %p244 = scmp.eq.s32.totalorder %s15, 0
      %p245 = por %p243, %p244
      %p246 = scmp.ne.s32.totalorder %s235, %s238
      %p247 = scmp.eq.s32.totalorder %s20, 1
      %p248 = por %p246, %p247
      %p249 = scmp.ne.s32.totalorder %s238, %s239
      %p250 = scmp.eq.s32.totalorder %s20, 0
      %p251 = por %p249, %p250
      %p252 = scmp.ne.s32.totalorder %s238, %s239
      %p253 = scmp.eq.s32.totalorder %s21, 1
      %p254 = por %p252, %p253
      %p256 = scmp.ne.s32.totalorder %s239, %s255
      %p257 = scmp.eq.s32.totalorder %s21, 0
      %p258 = por %p256, %p257
      %p259 = scmp.le.s32.totalorder 1, %s15
      %p260 = scmp.lt.s32.totalorder %s15, 3
      %p261 = pnand %p259, %p260
      %p262 = pneg %p261
      // Predicated region
      $region9: #{pointgencon_forward.1} parent=5 // pred_check
        _
      $region10: #{pointgencon_forward.1} parent=5 // pred_check_branch
        %264 = sbr.rel (%p261) target = $region12
      $region11: #{pointgencon_forward.1} parent=5 // pred_region
        %s265 = ssub.s32 %s15, 1
        // Predicated region
        $region13: #{pointgencon_forward.1} parent=11 // pred_check
          %p266 = pneg %p76
        $region14: #{pointgencon_forward.1} parent=11 // pred_check_branch
          %268 = sbr.rel (%p266) target = $region16
        $region15: #{pointgencon_forward.1} parent=11 // pred_region
          _
        $region16: #{pointgencon_forward.1} parent=11 // pred_fallthru
          _
        // Predicated region
        $region17: #{pointgencon_forward.1} parent=11 // pred_check
          %p269 = pneg %p97
        $region18: #{pointgencon_forward.1} parent=11 // pred_check_branch
          %271 = sbr.rel (%p269) target = $region20
        $region19: #{pointgencon_forward.1} parent=11 // pred_region
          _
        $region20: #{pointgencon_forward.1} parent=11 // pred_fallthru
          _
        // Predicated region
        $region21: #{pointgencon_forward.1} parent=11 // pred_check
          %p272 = pneg %p118
        $region22: #{pointgencon_forward.1} parent=11 // pred_check_branch
          %274 = sbr.rel (%p272) target = $region24
        $region23: #{pointgencon_forward.1} parent=11 // pred_region
          _
        $region24: #{pointgencon_forward.1} parent=11 // pred_fallthru
          _
        // Predicated region
        $region25: #{pointgencon_forward.1} parent=11 // pred_check
          %p275 = pneg %p139
        $region26: #{pointgencon_forward.1} parent=11 // pred_check_branch
          %277 = sbr.rel (%p275) target = $region28
        $region27: #{pointgencon_forward.1} parent=11 // pred_region
          _
        $region28: #{pointgencon_forward.1} parent=11 // pred_fallthru
          _
        // Predicated region
        $region29: #{pointgencon_forward.1} parent=11 // pred_check
          %p278 = pneg %p160
        $region30: #{pointgencon_forward.1} parent=11 // pred_check_branch
          %280 = sbr.rel (%p278) target = $region32
        $region31: #{pointgencon_forward.1} parent=11 // pred_region
          _
        $region32: #{pointgencon_forward.1} parent=11 // pred_fallthru
          _
        // Predicated region
        $region33: #{pointgencon_forward.1} parent=11 // pred_check
          %p281 = pneg %p181
        $region34: #{pointgencon_forward.1} parent=11 // pred_check_branch
          %283 = sbr.rel (%p281) target = $region36
        $region35: #{pointgencon_forward.1} parent=11 // pred_region
          _
        $region36: #{pointgencon_forward.1} parent=11 // pred_fallthru
          _
        // Predicated region
        $region37: #{pointgencon_forward.1} parent=11 // pred_check
          %p284 = pneg %p202
        $region38: #{pointgencon_forward.1} parent=11 // pred_check_branch
          %286 = sbr.rel (%p284) target = $region40
        $region39: #{pointgencon_forward.1} parent=11 // pred_region
          _
        $region40: #{pointgencon_forward.1} parent=11 // pred_fallthru
          _
        // Predicated region
        $region41: #{pointgencon_forward.1} parent=11 // pred_check
          %p287 = pneg %p223
        $region42: #{pointgencon_forward.1} parent=11 // pred_check_branch
          %289 = sbr.rel (%p287) target = $region44
        $region43: #{pointgencon_forward.1} parent=11 // pred_region
          _
        $region44: #{pointgencon_forward.1} parent=11 // pred_fallthru
          _
      $region12: #{pointgencon_forward.1} parent=5 // pred_fallthru
        _
      %p290 = scmp.lt.s32.totalorder %s15, 2
      // Predicated region
      $region45: #{pointgencon_forward.1} parent=5 // pred_check
        %p291 = pneg %p290
      $region46: #{pointgencon_forward.1} parent=5 // pred_check_branch
        %293 = sbr.rel (%p291) target = $region48
      $region47: #{pointgencon_forward.1} parent=5 // pred_region
        // Predicated region
        $region49: #{pointgencon_forward.1} parent=47 // pred_check
          %p294 = pneg %p49
        $region50: #{pointgencon_forward.1} parent=47 // pred_check_branch
          %296 = sbr.rel (%p294) target = $region52
        $region51: #{pointgencon_forward.1} parent=47 // pred_region
          %s297 = sand.u32 %s39, 1
          %s298 = sand.u32 %s39, 1
          %s299 = smul.addr %s298, 512
          %s300 = scalar_lea.vmem [#allocation2], %s299
          %s301 = smul.u32 2, %s22
          %s302 = smul.u32 4, %s23
          %s303 = smul.addr %s301, 128
          %s304 = sadd.s32 %s302, %s303
          %s305 = smul.addr %s304, 4
          %s306 = scalar_lea.vmem %s0, %s305
          // Predicated region
          $region53: #{pointgencon_forward.1} parent=51 // pred_check
            _
          $region54: #{pointgencon_forward.1} parent=51 // pred_check_branch
            %308 = sbr.rel (0) target = $region56
          $region55: #{pointgencon_forward.1} parent=51 // pred_region
            // Predicated region
            $region57: #{pointgencon_forward.1} parent=55 // pred_check
              _
            $region58: #{pointgencon_forward.1} parent=55 // pred_check_branch
              %310 = sbr.rel (0) target = $region60
            $region59: #{pointgencon_forward.1} parent=55 // pred_region
              loop: start=0, step=1, limit=1
              $region61: #{pointgencon_forward.1} parent=59 // loop_pre_header
                _
              $region62: #{pointgencon_forward.1} parent=59 // loop_header
                %s312 = sphi 0, %s316
                %p313 = scmp.ge.s32.totalorder %s312, 1
                %s317 = sphi %s306, %s306
                %s318 = sphi %s300, %s300
              $region63: #{pointgencon_forward.1} parent=59 // loop_header_branch
                %315 = sbr.rel (%p313) target = $region67
              $region64: #{pointgencon_forward.1} parent=59 // loop_body
                %v319 = vld [vmem:[%s317] sm:$0xff]
                %320 = vst [vmem:[%s318] sm:$0xff] %v319
                %v321 = vld [vmem:[%s317 + $0x8] sm:$0xff]
                %322 = vst [vmem:[%s318 + $0x8] sm:$0xff] %v321
                %v323 = vld [vmem:[%s317 + $0x20] sm:$0xff]
                %324 = vst [vmem:[%s318 + $0x10] sm:$0xff] %v323
                %v325 = vld [vmem:[%s317 + $0x28] sm:$0xff]
                %326 = vst [vmem:[%s318 + $0x18] sm:$0xff] %v325
                %v327 = vld [vmem:[%s317 + $0x40] sm:$0xff]
                %328 = vst [vmem:[%s318 + $0x20] sm:$0xff] %v327
                %v329 = vld [vmem:[%s317 + $0x48] sm:$0xff]
                %330 = vst [vmem:[%s318 + $0x28] sm:$0xff] %v329
                %v331 = vld [vmem:[%s317 + $0x60] sm:$0xff]
                %332 = vst [vmem:[%s318 + $0x30] sm:$0xff] %v331
                %v333 = vld [vmem:[%s317 + $0x68] sm:$0xff]
                %334 = vst [vmem:[%s318 + $0x38] sm:$0xff] %v333
                %v335 = vld [vmem:[%s317 + $0x80] sm:$0xff]
                %336 = vst [vmem:[%s318 + $0x40] sm:$0xff] %v335
                %v337 = vld [vmem:[%s317 + $0x88] sm:$0xff]
                %338 = vst [vmem:[%s318 + $0x48] sm:$0xff] %v337
                %v339 = vld [vmem:[%s317 + $0xa0] sm:$0xff]
                %340 = vst [vmem:[%s318 + $0x50] sm:$0xff] %v339
                %v341 = vld [vmem:[%s317 + $0xa8] sm:$0xff]
                %342 = vst [vmem:[%s318 + $0x58] sm:$0xff] %v341
                %v343 = vld [vmem:[%s317 + $0xc0] sm:$0xff]
                %344 = vst [vmem:[%s318 + $0x60] sm:$0xff] %v343
                %v345 = vld [vmem:[%s317 + $0xc8] sm:$0xff]
                %346 = vst [vmem:[%s318 + $0x68] sm:$0xff] %v345
                %v347 = vld [vmem:[%s317 + $0xe0] sm:$0xff]
                %348 = vst [vmem:[%s318 + $0x70] sm:$0xff] %v347
                %v349 = vld [vmem:[%s317 + $0xe8] sm:$0xff]
                %350 = vst [vmem:[%s318 + $0x78] sm:$0xff] %v349
                %v351 = vld [vmem:[%s317 + $0x100] sm:$0xff]
                %352 = vst [vmem:[%s318 + $0x80] sm:$0xff] %v351
                %v353 = vld [vmem:[%s317 + $0x108] sm:$0xff]
                %354 = vst [vmem:[%s318 + $0x88] sm:$0xff] %v353
                %v355 = vld [vmem:[%s317 + $0x120] sm:$0xff]
                %356 = vst [vmem:[%s318 + $0x90] sm:$0xff] %v355
                %v357 = vld [vmem:[%s317 + $0x128] sm:$0xff]
                %358 = vst [vmem:[%s318 + $0x98] sm:$0xff] %v357
                %v359 = vld [vmem:[%s317 + $0x140] sm:$0xff]
                %360 = vst [vmem:[%s318 + $0xa0] sm:$0xff] %v359
                %v361 = vld [vmem:[%s317 + $0x148] sm:$0xff]
                %362 = vst [vmem:[%s318 + $0xa8] sm:$0xff] %v361
                %v363 = vld [vmem:[%s317 + $0x160] sm:$0xff]
                %364 = vst [vmem:[%s318 + $0xb0] sm:$0xff] %v363
                %v365 = vld [vmem:[%s317 + $0x168] sm:$0xff]
                %366 = vst [vmem:[%s318 + $0xb8] sm:$0xff] %v365
                %v367 = vld [vmem:[%s317 + $0x180] sm:$0xff]
                %368 = vst [vmem:[%s318 + $0xc0] sm:$0xff] %v367
                %v369 = vld [vmem:[%s317 + $0x188] sm:$0xff]
                %370 = vst [vmem:[%s318 + $0xc8] sm:$0xff] %v369
                %v371 = vld [vmem:[%s317 + $0x1a0] sm:$0xff]
                %372 = vst [vmem:[%s318 + $0xd0] sm:$0xff] %v371
                %v373 = vld [vmem:[%s317 + $0x1a8] sm:$0xff]
                %374 = vst [vmem:[%s318 + $0xd8] sm:$0xff] %v373
                %v375 = vld [vmem:[%s317 + $0x1c0] sm:$0xff]
                %376 = vst [vmem:[%s318 + $0xe0] sm:$0xff] %v375
                %v377 = vld [vmem:[%s317 + $0x1c8] sm:$0xff]
                %378 = vst [vmem:[%s318 + $0xe8] sm:$0xff] %v377
                %v379 = vld [vmem:[%s317 + $0x1e0] sm:$0xff]
                %380 = vst [vmem:[%s318 + $0xf0] sm:$0xff] %v379
                %v381 = vld [vmem:[%s317 + $0x1e8] sm:$0xff]
                %382 = vst [vmem:[%s318 + $0xf8] sm:$0xff] %v381
                %v383 = vld [vmem:[%s317 + $0x200] sm:$0xff]
                %384 = vst [vmem:[%s318 + $0x100] sm:$0xff] %v383
                %v385 = vld [vmem:[%s317 + $0x208] sm:$0xff]
                %386 = vst [vmem:[%s318 + $0x108] sm:$0xff] %v385
                %v387 = vld [vmem:[%s317 + $0x220] sm:$0xff]
                %388 = vst [vmem:[%s318 + $0x110] sm:$0xff] %v387
                %v389 = vld [vmem:[%s317 + $0x228] sm:$0xff]
                %390 = vst [vmem:[%s318 + $0x118] sm:$0xff] %v389
                %v391 = vld [vmem:[%s317 + $0x240] sm:$0xff]
                %392 = vst [vmem:[%s318 + $0x120] sm:$0xff] %v391
                %v393 = vld [vmem:[%s317 + $0x248] sm:$0xff]
                %394 = vst [vmem:[%s318 + $0x128] sm:$0xff] %v393
                %v395 = vld [vmem:[%s317 + $0x260] sm:$0xff]
                %396 = vst [vmem:[%s318 + $0x130] sm:$0xff] %v395
                %v397 = vld [vmem:[%s317 + $0x268] sm:$0xff]
                %398 = vst [vmem:[%s318 + $0x138] sm:$0xff] %v397
                %v399 = vld [vmem:[%s317 + $0x280] sm:$0xff]
                %400 = vst [vmem:[%s318 + $0x140] sm:$0xff] %v399
                %v401 = vld [vmem:[%s317 + $0x288] sm:$0xff]
                %402 = vst [vmem:[%s318 + $0x148] sm:$0xff] %v401
                %v403 = vld [vmem:[%s317 + $0x2a0] sm:$0xff]
                %404 = vst [vmem:[%s318 + $0x150] sm:$0xff] %v403
                %v405 = vld [vmem:[%s317 + $0x2a8] sm:$0xff]
                %406 = vst [vmem:[%s318 + $0x158] sm:$0xff] %v405
                %v407 = vld [vmem:[%s317 + $0x2c0] sm:$0xff]
                %408 = vst [vmem:[%s318 + $0x160] sm:$0xff] %v407
                %v409 = vld [vmem:[%s317 + $0x2c8] sm:$0xff]
                %410 = vst [vmem:[%s318 + $0x168] sm:$0xff] %v409
                %v411 = vld [vmem:[%s317 + $0x2e0] sm:$0xff]
                %412 = vst [vmem:[%s318 + $0x170] sm:$0xff] %v411
                %v413 = vld [vmem:[%s317 + $0x2e8] sm:$0xff]
                %414 = vst [vmem:[%s318 + $0x178] sm:$0xff] %v413
                %v415 = vld [vmem:[%s317 + $0x300] sm:$0xff]
                %416 = vst [vmem:[%s318 + $0x180] sm:$0xff] %v415
                %v417 = vld [vmem:[%s317 + $0x308] sm:$0xff]
                %418 = vst [vmem:[%s318 + $0x188] sm:$0xff] %v417
                %v419 = vld [vmem:[%s317 + $0x320] sm:$0xff]
                %420 = vst [vmem:[%s318 + $0x190] sm:$0xff] %v419
                %v421 = vld [vmem:[%s317 + $0x328] sm:$0xff]
                %422 = vst [vmem:[%s318 + $0x198] sm:$0xff] %v421
                %v423 = vld [vmem:[%s317 + $0x340] sm:$0xff]
                %424 = vst [vmem:[%s318 + $0x1a0] sm:$0xff] %v423
                %v425 = vld [vmem:[%s317 + $0x348] sm:$0xff]
                %426 = vst [vmem:[%s318 + $0x1a8] sm:$0xff] %v425
                %v427 = vld [vmem:[%s317 + $0x360] sm:$0xff]
                %428 = vst [vmem:[%s318 + $0x1b0] sm:$0xff] %v427
                %v429 = vld [vmem:[%s317 + $0x368] sm:$0xff]
                %430 = vst [vmem:[%s318 + $0x1b8] sm:$0xff] %v429
                %v431 = vld [vmem:[%s317 + $0x380] sm:$0xff]
                %432 = vst [vmem:[%s318 + $0x1c0] sm:$0xff] %v431
                %v433 = vld [vmem:[%s317 + $0x388] sm:$0xff]
                %434 = vst [vmem:[%s318 + $0x1c8] sm:$0xff] %v433
                %v435 = vld [vmem:[%s317 + $0x3a0] sm:$0xff]
                %436 = vst [vmem:[%s318 + $0x1d0] sm:$0xff] %v435
                %v437 = vld [vmem:[%s317 + $0x3a8] sm:$0xff]
                %438 = vst [vmem:[%s318 + $0x1d8] sm:$0xff] %v437
                %v439 = vld [vmem:[%s317 + $0x3c0] sm:$0xff]
                %440 = vst [vmem:[%s318 + $0x1e0] sm:$0xff] %v439
                %v441 = vld [vmem:[%s317 + $0x3c8] sm:$0xff]
                %442 = vst [vmem:[%s318 + $0x1e8] sm:$0xff] %v441
                %v443 = vld [vmem:[%s317 + $0x3e0] sm:$0xff]
                %444 = vst [vmem:[%s318 + $0x1f0] sm:$0xff] %v443
                %v445 = vld [vmem:[%s317 + $0x3e8] sm:$0xff]
                %446 = vst [vmem:[%s318 + $0x1f8] sm:$0xff] %v445
              $region65: #{pointgencon_forward.1} parent=59 // loop_footer
                %s316 = sadd.s32 1, %s312
              $region66: #{pointgencon_forward.1} parent=59 // loop_footer_branch
                %311 = sbr.rel target = $region62
              $region67: #{pointgencon_forward.1} parent=59 // loop_exit
                _
            $region60: #{pointgencon_forward.1} parent=55 // pred_fallthru
              _
            // Predicated region
            $region68: #{pointgencon_forward.1} parent=55 // pred_check
              _
            $region69: #{pointgencon_forward.1} parent=55 // pred_check_branch
              %448 = sbr.rel target = $region71
            $region70: #{pointgencon_forward.1} parent=55 // pred_region
              _
            $region71: #{pointgencon_forward.1} parent=55 // pred_fallthru
              _
          $region56: #{pointgencon_forward.1} parent=51 // pred_fallthru
            _
          %449 = vnop
        $region52: #{pointgencon_forward.1} parent=47 // pred_fallthru
          _
      $region48: #{pointgencon_forward.1} parent=5 // pred_fallthru
        _
      %p450 = scmp.le.s32.totalorder 1, %s15
      %p451 = scmp.lt.s32.totalorder %s15, 3
      %p452 = pnand %p450, %p451
      %p453 = pneg %p452
      // Predicated region
      $region72: #{pointgencon_forward.1} parent=5 // pred_check
        _
      $region73: #{pointgencon_forward.1} parent=5 // pred_check_branch
        %455 = sbr.rel (%p452) target = $region75
      $region74: #{pointgencon_forward.1} parent=5 // pred_region
        %s456 = ssub.s32 %s15, 1
        %s457 = sand.u32 %s42, 1
        %s458 = sand.u32 %s42, 1
        %s459 = smul.addr %s458, 512
        %s460 = scalar_lea.vmem [#allocation2], %s459
        // Predicated region
        $region76: #{pointgencon_forward.1} parent=74 // pred_check
          %p461 = pneg %p55
        $region77: #{pointgencon_forward.1} parent=74 // pred_check_branch
          %463 = sbr.rel (%p461) target = $region79
        $region78: #{pointgencon_forward.1} parent=74 // pred_region
          _
        $region79: #{pointgencon_forward.1} parent=74 // pred_fallthru
          _
        %s464 = sand.u32 %s42, 1
        %s465 = sand.u32 %s42, 1
        %s466 = smul.addr %s465, 512
        %s467 = scalar_lea.vmem [#allocation2], %s466
        %p468 = pneg %p55
        %p469 = pneg %p52
        %p470 = pneg %p76
        %p471 = pneg %p73
        %p472 = pneg %p97
        %p473 = pneg %p94
        %p474 = pneg %p118
        %p475 = pneg %p115
        %p476 = pneg %p139
        %p477 = pneg %p136
        %p478 = pneg %p160
        %p479 = pneg %p157
        %p480 = pneg %p181
        %p481 = pneg %p178
        %p482 = pneg %p202
        %p483 = pneg %p199
        %p484 = pneg %p223
        %p485 = pneg %p220
        %p486 = pneg %p251
        %p487 = pneg %p248
        %s488 = sand.u32 %s238, 1
        %s489 = sand.u32 %s238, 1
        %s490 = smul.addr %s489, 32
        %s491 = scalar_lea.vmem [#allocation3], %s490
        %s492 = smul.u32 2, %s24
        %s493 = smul.u32 4, %s25
        %s494 = smul.u32 2, %s24
        %s495 = smul.u32 4, %s25
        %v497 = vld [vmem:[%s1] sm:$0xf]
        %v498 = vld [vmem:[%s1 + $0x4] sm:$0xf]
        %v499 = vld [vmem:[%s1 + $0x8] sm:$0xf]
        %v500 = vld [vmem:[%s1 + $0xc] sm:$0xf]
        %v501 = vld [vmem:[%s1 + $0x10] sm:$0xf]
        %v502 = vld [vmem:[%s1 + $0x14] sm:$0xf]
        %v503 = vld [vmem:[%s1 + $0x18] sm:$0xf]
        %v504 = vld [vmem:[%s1 + $0x1c] sm:$0xf]
        %v505 = vld [vmem:[%s1 + $0x20] sm:$0xf]
        %v506 = vld [vmem:[%s1 + $0x24] sm:$0xf]
        %v507 = vld [vmem:[%s1 + $0x28] sm:$0xf]
        %v508 = vld [vmem:[%s1 + $0x2c] sm:$0xf]
        %v509 = vld [vmem:[%s1 + $0x30] sm:$0xf]
        %v510 = vld [vmem:[%s1 + $0x34] sm:$0xf]
        %v511 = vld [vmem:[%s1 + $0x38] sm:$0xf]
        %v512 = vld [vmem:[%s1 + $0x3c] sm:$0xf]
        %v513 = vld [vmem:[%s3] sm:$0xf]
        %v514 = vld [vmem:[%s3 + $0x4] sm:$0xf]
        %v515 = vld [vmem:[%s3 + $0x8] sm:$0xf]
        %v516 = vld [vmem:[%s3 + $0xc] sm:$0xf]
        %v517 = vld [vmem:[%s3 + $0x10] sm:$0xf]
        %v518 = vld [vmem:[%s3 + $0x14] sm:$0xf]
        %v519 = vld [vmem:[%s3 + $0x18] sm:$0xf]
        %v520 = vld [vmem:[%s3 + $0x1c] sm:$0xf]
        %v521 = vld [vmem:[%s5] sm:$0xf]
        %v522 = vld [vmem:[%s5 + $0x4] sm:$0xf]
        %v523 = vld [vmem:[%s5 + $0x8] sm:$0xf]
        %v524 = vld [vmem:[%s5 + $0xc] sm:$0xf]
        %v525 = vld [vmem:[%s7] sm:$0xf]
        %v526 = vld [vmem:[%s2] sm:$0xff]
        %v527 = vld [vmem:[%s2 + $0x8] sm:$0xff]
        %v528 = vld [vmem:[%s2 + $0x10] sm:$0xff]
        %v529 = vld [vmem:[%s2 + $0x18] sm:$0xff]
        %v530 = vld [vmem:[%s2 + $0x20] sm:$0xff]
        %v531 = vld [vmem:[%s2 + $0x28] sm:$0xff]
        %v532 = vld [vmem:[%s2 + $0x30] sm:$0xff]
        %v533 = vld [vmem:[%s2 + $0x38] sm:$0xff]
        %v534 = vld [vmem:[%s2 + $0x40] sm:$0xff]
        %v535 = vld [vmem:[%s2 + $0x48] sm:$0xff]
        %v536 = vld [vmem:[%s2 + $0x50] sm:$0xff]
        %v537 = vld [vmem:[%s2 + $0x58] sm:$0xff]
        %v538 = vld [vmem:[%s2 + $0x60] sm:$0xff]
        %v539 = vld [vmem:[%s2 + $0x68] sm:$0xff]
        %v540 = vld [vmem:[%s2 + $0x70] sm:$0xff]
        %v541 = vld [vmem:[%s2 + $0x78] sm:$0xff]
        %v542 = vld [vmem:[%s4] sm:$0xff]
        %v543 = vld [vmem:[%s4 + $0x8] sm:$0xff]
        %v544 = vld [vmem:[%s4 + $0x10] sm:$0xff]
        %v545 = vld [vmem:[%s4 + $0x18] sm:$0xff]
        %v546 = vld [vmem:[%s4 + $0x20] sm:$0xff]
        %v547 = vld [vmem:[%s4 + $0x28] sm:$0xff]
        %v548 = vld [vmem:[%s4 + $0x30] sm:$0xff]
        %v549 = vld [vmem:[%s4 + $0x38] sm:$0xff]
        %v550 = vld [vmem:[%s6] sm:$0xff]
        %v551 = vld [vmem:[%s6 + $0x8] sm:$0xff]
        %v552 = vld [vmem:[%s6 + $0x10] sm:$0xff]
        %v553 = vld [vmem:[%s6 + $0x18] sm:$0xff]
        %v554 = vld [vmem:[%s8] sm:$0xff]
        %v555 = vld [vmem:[%s460] sm:$0xff]
        %v556 = vld [vmem:[%s460 + $0x8] sm:$0xff]
        %v557 = vld [vmem:[%s460 + $0x10] sm:$0xff]
        %v558 = vld [vmem:[%s460 + $0x18] sm:$0xff]
        %v559 = vld [vmem:[%s460 + $0x20] sm:$0xff]
        %v560 = vld [vmem:[%s460 + $0x28] sm:$0xff]
        %v561 = vld [vmem:[%s460 + $0x30] sm:$0xff]
        %v562 = vld [vmem:[%s460 + $0x38] sm:$0xff]
        %v563 = vld [vmem:[%s460 + $0x40] sm:$0xff]
        %v564 = vld [vmem:[%s460 + $0x48] sm:$0xff]
        %v565 = vld [vmem:[%s460 + $0x50] sm:$0xff]
        %v566 = vld [vmem:[%s460 + $0x58] sm:$0xff]
        %v567 = vld [vmem:[%s460 + $0x60] sm:$0xff]
        %v568 = vld [vmem:[%s460 + $0x68] sm:$0xff]
        %v569 = vld [vmem:[%s460 + $0x70] sm:$0xff]
        %v570 = vld [vmem:[%s460 + $0x78] sm:$0xff]
        %v571 = vld [vmem:[%s460 + $0x80] sm:$0xff]
        %v572 = vld [vmem:[%s460 + $0x88] sm:$0xff]
        %v573 = vld [vmem:[%s460 + $0x90] sm:$0xff]
        %v574 = vld [vmem:[%s460 + $0x98] sm:$0xff]
        %v575 = vld [vmem:[%s460 + $0xa0] sm:$0xff]
        %v576 = vld [vmem:[%s460 + $0xa8] sm:$0xff]
        %v577 = vld [vmem:[%s460 + $0xb0] sm:$0xff]
        %v578 = vld [vmem:[%s460 + $0xb8] sm:$0xff]
        %v579 = vld [vmem:[%s460 + $0xc0] sm:$0xff]
        %v580 = vld [vmem:[%s460 + $0xc8] sm:$0xff]
        %v581 = vld [vmem:[%s460 + $0xd0] sm:$0xff]
        %v582 = vld [vmem:[%s460 + $0xd8] sm:$0xff]
        %v583 = vld [vmem:[%s460 + $0xe0] sm:$0xff]
        %v584 = vld [vmem:[%s460 + $0xe8] sm:$0xff]
        %v585 = vld [vmem:[%s460 + $0xf0] sm:$0xff]
        %v586 = vld [vmem:[%s460 + $0xf8] sm:$0xff]
        %588 = vset.pattern.permute.xlu0 0
        %589 = vperm.xlu0 %588, %v526
        %v590 = vpop.permute.xlu0 %589
        %593 = vset.pattern.permute.xlu0 0
        %594 = vperm.xlu0 %593, %v527
        %v595 = vpop.permute.xlu0 %594
        %598 = vset.pattern.permute.xlu0 0
        %599 = vperm.xlu0 %598, %v528
        %v600 = vpop.permute.xlu0 %599
        %603 = vset.pattern.permute.xlu0 0
        %604 = vperm.xlu0 %603, %v529
        %v605 = vpop.permute.xlu0 %604
        %608 = vset.pattern.permute.xlu0 0
        %609 = vperm.xlu0 %608, %v530
        %v610 = vpop.permute.xlu0 %609
        %613 = vset.pattern.permute.xlu0 0
        %614 = vperm.xlu0 %613, %v531
        %v615 = vpop.permute.xlu0 %614
        %618 = vset.pattern.permute.xlu0 0
        %619 = vperm.xlu0 %618, %v532
        %v620 = vpop.permute.xlu0 %619
        %623 = vset.pattern.permute.xlu0 0
        %624 = vperm.xlu0 %623, %v533
        %v625 = vpop.permute.xlu0 %624
        %628 = vset.pattern.permute.xlu0 0
        %629 = vperm.xlu0 %628, %v534
        %v630 = vpop.permute.xlu0 %629
        %633 = vset.pattern.permute.xlu0 0
        %634 = vperm.xlu0 %633, %v535
        %v635 = vpop.permute.xlu0 %634
        %638 = vset.pattern.permute.xlu0 0
        %639 = vperm.xlu0 %638, %v536
        %v640 = vpop.permute.xlu0 %639
        %643 = vset.pattern.permute.xlu0 0
        %644 = vperm.xlu0 %643, %v537
        %v645 = vpop.permute.xlu0 %644
        %648 = vset.pattern.permute.xlu0 0
        %649 = vperm.xlu0 %648, %v538
        %v650 = vpop.permute.xlu0 %649
        %653 = vset.pattern.permute.xlu0 0
        %654 = vperm.xlu0 %653, %v539
        %v655 = vpop.permute.xlu0 %654
        %658 = vset.pattern.permute.xlu0 0
        %659 = vperm.xlu0 %658, %v540
        %v660 = vpop.permute.xlu0 %659
        %663 = vset.pattern.permute.xlu0 0
        %664 = vperm.xlu0 %663, %v541
        %v665 = vpop.permute.xlu0 %664
        %v683 = vunpack.c.l.b16 %v497
        %v684 = vunpack.c.l.b16 %v498
        %v685 = vunpack.c.l.b16 %v499
        %v686 = vunpack.c.l.b16 %v500
        %v687 = vunpack.c.l.b16 %v501
        %v688 = vunpack.c.l.b16 %v502
        %v689 = vunpack.c.l.b16 %v503
        %v690 = vunpack.c.l.b16 %v504
        %v691 = vunpack.c.l.b16 %v505
        %v692 = vunpack.c.l.b16 %v506
        %v693 = vunpack.c.l.b16 %v507
        %v694 = vunpack.c.l.b16 %v508
        %v695 = vunpack.c.l.b16 %v509
        %v696 = vunpack.c.l.b16 %v510
        %v697 = vunpack.c.l.b16 %v511
        %v698 = vunpack.c.l.b16 %v512
        %v699 = vpack.c.b16 %v684, %v683
        %v700 = vpack.c.b16 %v686, %v685
        %v701 = vpack.c.b16 %v688, %v687
        %v702 = vpack.c.b16 %v690, %v689
        %v703 = vpack.c.b16 %v692, %v691
        %v704 = vpack.c.b16 %v694, %v693
        %v705 = vpack.c.b16 %v696, %v695
        %v706 = vpack.c.b16 %v698, %v697
        %v747 = vunpack.c.l.b16 %v555
        %v748 = vunpack.c.h.b16 %v555
        %v749 = vunpack.c.l.b16 %v556
        %v750 = vunpack.c.h.b16 %v556
        %v751 = vunpack.c.l.b16 %v557
        %v752 = vunpack.c.h.b16 %v557
        %v753 = vunpack.c.l.b16 %v558
        %v754 = vunpack.c.h.b16 %v558
        %v755 = vunpack.c.l.b16 %v559
        %v756 = vunpack.c.h.b16 %v559
        %v757 = vunpack.c.l.b16 %v560
        %v758 = vunpack.c.h.b16 %v560
        %v759 = vunpack.c.l.b16 %v561
        %v760 = vunpack.c.h.b16 %v561
        %v761 = vunpack.c.l.b16 %v562
        %v762 = vunpack.c.h.b16 %v562
        %v763 = vunpack.c.l.b16 %v563
        %v764 = vunpack.c.h.b16 %v563
        %v765 = vunpack.c.l.b16 %v564
        %v766 = vunpack.c.h.b16 %v564
        %v767 = vunpack.c.l.b16 %v565
        %v768 = vunpack.c.h.b16 %v565
        %v769 = vunpack.c.l.b16 %v566
        %v770 = vunpack.c.h.b16 %v566
        %v771 = vunpack.c.l.b16 %v567
        %v772 = vunpack.c.h.b16 %v567
        %v773 = vunpack.c.l.b16 %v568
        %v774 = vunpack.c.h.b16 %v568
        %v775 = vunpack.c.l.b16 %v569
        %v776 = vunpack.c.h.b16 %v569
        %v777 = vunpack.c.l.b16 %v570
        %v778 = vunpack.c.h.b16 %v570
        %v779 = vunpack.c.l.b16 %v571
        %v780 = vunpack.c.h.b16 %v571
        %v781 = vunpack.c.l.b16 %v572
        %v782 = vunpack.c.h.b16 %v572
        %v783 = vunpack.c.l.b16 %v573
        %v784 = vunpack.c.h.b16 %v573
        %v785 = vunpack.c.l.b16 %v574
        %v786 = vunpack.c.h.b16 %v574
        %v787 = vunpack.c.l.b16 %v575
        %v788 = vunpack.c.h.b16 %v575
        %v789 = vunpack.c.l.b16 %v576
        %v790 = vunpack.c.h.b16 %v576
        %v791 = vunpack.c.l.b16 %v577
        %v792 = vunpack.c.h.b16 %v577
        %v793 = vunpack.c.l.b16 %v578
        %v794 = vunpack.c.h.b16 %v578
        %v795 = vunpack.c.l.b16 %v579
        %v796 = vunpack.c.h.b16 %v579
        %v797 = vunpack.c.l.b16 %v580
        %v798 = vunpack.c.h.b16 %v580
        %v799 = vunpack.c.l.b16 %v581
        %v800 = vunpack.c.h.b16 %v581
        %v801 = vunpack.c.l.b16 %v582
        %v802 = vunpack.c.h.b16 %v582
        %v803 = vunpack.c.l.b16 %v583
        %v804 = vunpack.c.h.b16 %v583
        %v805 = vunpack.c.l.b16 %v584
        %v806 = vunpack.c.h.b16 %v584
        %v807 = vunpack.c.l.b16 %v585
        %v808 = vunpack.c.h.b16 %v585
        %v809 = vunpack.c.l.b16 %v586
        %v810 = vunpack.c.h.b16 %v586
        %v811 = vpack.c.b16 %v751, %v747
        %v812 = vpack.c.b16 %v752, %v748
        %v813 = vpack.c.b16 %v753, %v749
        %v814 = vpack.c.b16 %v754, %v750
        %v815 = vpack.c.b16 %v759, %v755
        %v816 = vpack.c.b16 %v760, %v756
        %v817 = vpack.c.b16 %v761, %v757
        %v818 = vpack.c.b16 %v762, %v758
        %v819 = vpack.c.b16 %v767, %v763
        %v820 = vpack.c.b16 %v768, %v764
        %v821 = vpack.c.b16 %v769, %v765
        %v822 = vpack.c.b16 %v770, %v766
        %v823 = vpack.c.b16 %v775, %v771
        %v824 = vpack.c.b16 %v776, %v772
        %v825 = vpack.c.b16 %v777, %v773
        %v826 = vpack.c.b16 %v778, %v774
        %v827 = vpack.c.b16 %v783, %v779
        %v828 = vpack.c.b16 %v784, %v780
        %v829 = vpack.c.b16 %v785, %v781
        %v830 = vpack.c.b16 %v786, %v782
        %v831 = vpack.c.b16 %v791, %v787
        %v832 = vpack.c.b16 %v792, %v788
        %v833 = vpack.c.b16 %v793, %v789
        %v834 = vpack.c.b16 %v794, %v790
        %v835 = vpack.c.b16 %v799, %v795
        %v836 = vpack.c.b16 %v800, %v796
        %v837 = vpack.c.b16 %v801, %v797
        %v838 = vpack.c.b16 %v802, %v798
        %v839 = vpack.c.b16 %v807, %v803
        %v840 = vpack.c.b16 %v808, %v804
        %v841 = vpack.c.b16 %v809, %v805
        %v842 = vpack.c.b16 %v810, %v806
        %875 = vmatprep.subr.bf16.mxu0 %v812
        %876 = vmatpush1.bf16.msra.mxu0 %v811
        %877 = vmatprep.subr.bf16.mxu0 %v816
        %878 = vmatpush1.bf16.msra.mxu0 %v815
        %879 = vmatprep.subr.bf16.mxu0 %v820
        %880 = vmatpush1.bf16.msra.mxu0 %v819
        %881 = vmatprep.subr.bf16.mxu0 %v824
        %882 = vmatpush1.bf16.msra.mxu0 %v823
        %883 = vmatprep.subr.bf16.mxu0 %v828
        %884 = vmatpush1.bf16.msra.mxu0 %v827
        %885 = vmatprep.subr.bf16.mxu0 %v832
        %886 = vmatpush1.bf16.msra.mxu0 %v831
        %887 = vmatprep.subr.bf16.mxu0 %v836
        %888 = vmatpush1.bf16.msra.mxu0 %v835
        %889 = vmatprep.subr.bf16.mxu0 %v840
        %890 = vmatpush1.bf16.msra.mxu0 %v839
        %891 = vmatprep.subr.bf16.mxu0 0
        %892 = vmatpush1.bf16.msra.mxu0 0
        %893 = vmatprep.subr.bf16.mxu0 0
        %894 = vmatpush1.bf16.msra.mxu0 0
        %895 = vmatprep.subr.bf16.mxu0 0
        %896 = vmatpush1.bf16.msra.mxu0 0
        %897 = vmatprep.subr.bf16.mxu0 0
        %898 = vmatpush1.bf16.msra.mxu0 0
        %899 = vmatprep.subr.bf16.mxu0 0
        %900 = vmatpush1.bf16.msra.mxu0 0
        %901 = vmatprep.subr.bf16.mxu0 0
        %902 = vmatpush1.bf16.msra.mxu0 0
        %903 = vmatprep.subr.bf16.mxu0 0
        %904 = vmatpush1.bf16.msra.mxu0 0
        %905 = vmatprep.subr.bf16.mxu0 0
        %906 = vmatpush1.bf16.msra.mxu0 0
        %907 = vmatprep.mubr.bf16.mxu0 0
        %908 = vmatmul.mubr.bf16.gmra.mrb[0].mxu0 %v699
        %v909 = vpop.f32.mrb[0].mxu0
        %v910 = vadd.f32 %v590, %v909
        %v911 = vpop.f32.mrb[0].mxu0
        %v912 = vadd.f32 %v590, %v911
        %v913 = vpop.f32.mrb[0].mxu0
        %v914 = vadd.f32 %v595, %v913
        %v915 = vpop.f32.mrb[0].mxu0
        %v916 = vadd.f32 %v595, %v915
        %917 = vmatprep.mubr.bf16.mxu0 0
        %918 = vmatmul.mubr.bf16.gmra.mrb[0].mxu0 %v700
        %v919 = vpop.f32.mrb[0].mxu0
        %v920 = vadd.f32 %v600, %v919
        %v921 = vpop.f32.mrb[0].mxu0
        %v922 = vadd.f32 %v600, %v921
        %v923 = vpop.f32.mrb[0].mxu0
        %v924 = vadd.f32 %v605, %v923
        %v925 = vpop.f32.mrb[0].mxu0
        %v926 = vadd.f32 %v605, %v925
        %927 = vmatprep.mubr.bf16.mxu0 0
        %928 = vmatmul.mubr.bf16.gmra.mrb[0].mxu0 %v701
        %v929 = vpop.f32.mrb[0].mxu0
        %v930 = vadd.f32 %v610, %v929
        %v931 = vpop.f32.mrb[0].mxu0
        %v932 = vadd.f32 %v610, %v931
        %v933 = vpop.f32.mrb[0].mxu0
        %v934 = vadd.f32 %v615, %v933
        %v935 = vpop.f32.mrb[0].mxu0
        %v936 = vadd.f32 %v615, %v935
        %937 = vmatprep.mubr.bf16.mxu0 0
        %938 = vmatmul.mubr.bf16.gmra.mrb[0].mxu0 %v702
        %v939 = vpop.f32.mrb[0].mxu0
        %v940 = vadd.f32 %v620, %v939
        %v941 = vpop.f32.mrb[0].mxu0
        %v942 = vadd.f32 %v620, %v941
        %v943 = vpop.f32.mrb[0].mxu0
        %v944 = vadd.f32 %v625, %v943
        %v945 = vpop.f32.mrb[0].mxu0
        %v946 = vadd.f32 %v625, %v945
        %947 = vmatprep.mubr.bf16.mxu0 0
        %948 = vmatmul.mubr.bf16.gmra.mrb[0].mxu0 %v703
        %v949 = vpop.f32.mrb[0].mxu0
        %v950 = vadd.f32 %v630, %v949
        %v951 = vpop.f32.mrb[0].mxu0
        %v952 = vadd.f32 %v630, %v951
        %v953 = vpop.f32.mrb[0].mxu0
        %v954 = vadd.f32 %v635, %v953
        %v955 = vpop.f32.mrb[0].mxu0
        %v956 = vadd.f32 %v635, %v955
        %957 = vmatprep.mubr.bf16.mxu0 0
        %958 = vmatmul.mubr.bf16.gmra.mrb[0].mxu0 %v704
        %v959 = vpop.f32.mrb[0].mxu0
        %v960 = vadd.f32 %v640, %v959
        %v961 = vpop.f32.mrb[0].mxu0
        %v962 = vadd.f32 %v640, %v961
        %v963 = vpop.f32.mrb[0].mxu0
        %v964 = vadd.f32 %v645, %v963
        %v965 = vpop.f32.mrb[0].mxu0
        %v966 = vadd.f32 %v645, %v965
        %967 = vmatprep.mubr.bf16.mxu0 0
        %968 = vmatmul.mubr.bf16.gmra.mrb[0].mxu0 %v705
        %v969 = vpop.f32.mrb[0].mxu0
        %v970 = vadd.f32 %v650, %v969
        %v971 = vpop.f32.mrb[0].mxu0
        %v972 = vadd.f32 %v650, %v971
        %v973 = vpop.f32.mrb[0].mxu0
        %v974 = vadd.f32 %v655, %v973
        %v975 = vpop.f32.mrb[0].mxu0
        %v976 = vadd.f32 %v655, %v975
        %977 = vmatprep.mubr.bf16.mxu0 0
        %978 = vmatmul.mubr.bf16.gmra.mrb[0].mxu0 %v706
        %v979 = vpop.f32.mrb[0].mxu0
        %v980 = vadd.f32 %v660, %v979
        %v981 = vpop.f32.mrb[0].mxu0
        %v982 = vadd.f32 %v660, %v981
        %v983 = vpop.f32.mrb[0].mxu0
        %v984 = vadd.f32 %v665, %v983
        %v985 = vpop.f32.mrb[0].mxu0
        %v986 = vadd.f32 %v665, %v985
        %987 = vdwg.mxu0
        %988 = vmatprep.subr.bf16.mxu0 %v814
        %989 = vmatpush1.bf16.msra.mxu0 %v813
        %990 = vmatprep.subr.bf16.mxu0 %v818
        %991 = vmatpush1.bf16.msra.mxu0 %v817
        %992 = vmatprep.subr.bf16.mxu0 %v822
        %993 = vmatpush1.bf16.msra.mxu0 %v821
        %994 = vmatprep.subr.bf16.mxu0 %v826
        %995 = vmatpush1.bf16.msra.mxu0 %v825
        %996 = vmatprep.subr.bf16.mxu0 %v830
        %997 = vmatpush1.bf16.msra.mxu0 %v829
        %998 = vmatprep.subr.bf16.mxu0 %v834
        %999 = vmatpush1.bf16.msra.mxu0 %v833
        %1000 = vmatprep.subr.bf16.mxu0 %v838
        %1001 = vmatpush1.bf16.msra.mxu0 %v837
        %1002 = vmatprep.subr.bf16.mxu0 %v842
        %1003 = vmatpush1.bf16.msra.mxu0 %v841
        %1004 = vmatprep.subr.bf16.mxu0 0
        %1005 = vmatpush1.bf16.msra.mxu0 0
        %1006 = vmatprep.subr.bf16.mxu0 0
        %1007 = vmatpush1.bf16.msra.mxu0 0
        %1008 = vmatprep.subr.bf16.mxu0 0
        %1009 = vmatpush1.bf16.msra.mxu0 0
        %1010 = vmatprep.subr.bf16.mxu0 0
        %1011 = vmatpush1.bf16.msra.mxu0 0
        %1012 = vmatprep.subr.bf16.mxu0 0
        %1013 = vmatpush1.bf16.msra.mxu0 0
        %1014 = vmatprep.subr.bf16.mxu0 0
        %1015 = vmatpush1.bf16.msra.mxu0 0
        %1016 = vmatprep.subr.bf16.mxu0 0
        %1017 = vmatpush1.bf16.msra.mxu0 0
        %1018 = vmatprep.subr.bf16.mxu0 0
        %1019 = vmatpush1.bf16.msra.mxu0 0
        %1020 = vmatprep.mubr.bf16.mxu0 0
        %1021 = vmatmul.mubr.bf16.gmra.mrb[0].mxu0 %v699
        %v1022 = vpop.f32.mrb[0].mxu0
        %v1023 = vadd.f32 %v590, %v1022
        %v1024 = vpop.f32.mrb[0].mxu0
        %v1025 = vadd.f32 %v590, %v1024
        %v1026 = vpop.f32.mrb[0].mxu0
        %v1027 = vadd.f32 %v595, %v1026
        %v1028 = vpop.f32.mrb[0].mxu0
        %v1029 = vadd.f32 %v595, %v1028
        %1030 = vmatprep.mubr.bf16.mxu0 0
        %1031 = vmatmul.mubr.bf16.gmra.mrb[0].mxu0 %v700
        %v1032 = vpop.f32.mrb[0].mxu0
        %v1033 = vadd.f32 %v600, %v1032
        %v1034 = vpop.f32.mrb[0].mxu0
        %v1035 = vadd.f32 %v600, %v1034
        %v1036 = vpop.f32.mrb[0].mxu0
        %v1037 = vadd.f32 %v605, %v1036
        %v1038 = vpop.f32.mrb[0].mxu0
        %v1039 = vadd.f32 %v605, %v1038
        %1040 = vmatprep.mubr.bf16.mxu0 0
        %1041 = vmatmul.mubr.bf16.gmra.mrb[0].mxu0 %v701
        %v1042 = vpop.f32.mrb[0].mxu0
        %v1043 = vadd.f32 %v610, %v1042
        %v1044 = vpop.f32.mrb[0].mxu0
        %v1045 = vadd.f32 %v610, %v1044
        %v1046 = vpop.f32.mrb[0].mxu0
        %v1047 = vadd.f32 %v615, %v1046
        %v1048 = vpop.f32.mrb[0].mxu0
        %v1049 = vadd.f32 %v615, %v1048
        %1050 = vmatprep.mubr.bf16.mxu0 0
        %1051 = vmatmul.mubr.bf16.gmra.mrb[0].mxu0 %v702
        %v1052 = vpop.f32.mrb[0].mxu0
        %v1053 = vadd.f32 %v620, %v1052
        %v1054 = vpop.f32.mrb[0].mxu0
        %v1055 = vadd.f32 %v620, %v1054
        %v1056 = vpop.f32.mrb[0].mxu0
        %v1057 = vadd.f32 %v625, %v1056
        %v1058 = vpop.f32.mrb[0].mxu0
        %v1059 = vadd.f32 %v625, %v1058
        %1060 = vmatprep.mubr.bf16.mxu0 0
        %1061 = vmatmul.mubr.bf16.gmra.mrb[0].mxu0 %v703
        %v1062 = vpop.f32.mrb[0].mxu0
        %v1063 = vadd.f32 %v630, %v1062
        %v1064 = vpop.f32.mrb[0].mxu0
        %v1065 = vadd.f32 %v630, %v1064
        %v1066 = vpop.f32.mrb[0].mxu0
        %v1067 = vadd.f32 %v635, %v1066
        %v1068 = vpop.f32.mrb[0].mxu0
        %v1069 = vadd.f32 %v635, %v1068
        %1070 = vmatprep.mubr.bf16.mxu0 0
        %1071 = vmatmul.mubr.bf16.gmra.mrb[0].mxu0 %v704
        %v1072 = vpop.f32.mrb[0].mxu0
        %v1073 = vadd.f32 %v640, %v1072
        %v1074 = vpop.f32.mrb[0].mxu0
        %v1075 = vadd.f32 %v640, %v1074
        %v1076 = vpop.f32.mrb[0].mxu0
        %v1077 = vadd.f32 %v645, %v1076
        %v1078 = vpop.f32.mrb[0].mxu0
        %v1079 = vadd.f32 %v645, %v1078
        %1080 = vmatprep.mubr.bf16.mxu0 0
        %1081 = vmatmul.mubr.bf16.gmra.mrb[0].mxu0 %v705
        %v1082 = vpop.f32.mrb[0].mxu0
        %v1083 = vadd.f32 %v650, %v1082
        %v1084 = vpop.f32.mrb[0].mxu0
        %v1085 = vadd.f32 %v650, %v1084
        %v1086 = vpop.f32.mrb[0].mxu0
        %v1087 = vadd.f32 %v655, %v1086
        %v1088 = vpop.f32.mrb[0].mxu0
        %v1089 = vadd.f32 %v655, %v1088
        %1090 = vmatprep.mubr.bf16.mxu0 0
        %1091 = vmatmul.mubr.bf16.gmra.mrb[0].mxu0 %v706
        %v1092 = vpop.f32.mrb[0].mxu0
        %v1093 = vadd.f32 %v660, %v1092
        %v1094 = vpop.f32.mrb[0].mxu0
        %v1095 = vadd.f32 %v660, %v1094
        %v1096 = vpop.f32.mrb[0].mxu0
        %v1097 = vadd.f32 %v665, %v1096
        %v1098 = vpop.f32.mrb[0].mxu0
        %v1099 = vadd.f32 %v665, %v1098
        %1100 = vdwg.mxu0
        %v1101 = vmax.f32 %v910, 0.0
        %v1102 = vmax.f32 %v912, 0.0
        %v1103 = vmax.f32 %v1023, 0.0
        %v1104 = vmax.f32 %v1025, 0.0
        %v1105 = vmax.f32 %v914, 0.0
        %v1106 = vmax.f32 %v916, 0.0
        %v1107 = vmax.f32 %v1027, 0.0
        %v1108 = vmax.f32 %v1029, 0.0
        %v1109 = vmax.f32 %v920, 0.0
        %v1110 = vmax.f32 %v922, 0.0
        %v1111 = vmax.f32 %v1033, 0.0
        %v1112 = vmax.f32 %v1035, 0.0
        %v1113 = vmax.f32 %v924, 0.0
        %v1114 = vmax.f32 %v926, 0.0
        %v1115 = vmax.f32 %v1037, 0.0
        %v1116 = vmax.f32 %v1039, 0.0
        %v1117 = vmax.f32 %v930, 0.0
        %v1118 = vmax.f32 %v932, 0.0
        %v1119 = vmax.f32 %v1043, 0.0
        %v1120 = vmax.f32 %v1045, 0.0
        %v1121 = vmax.f32 %v934, 0.0
        %v1122 = vmax.f32 %v936, 0.0
        %v1123 = vmax.f32 %v1047, 0.0
        %v1124 = vmax.f32 %v1049, 0.0
        %v1125 = vmax.f32 %v940, 0.0
        %v1126 = vmax.f32 %v942, 0.0
        %v1127 = vmax.f32 %v1053, 0.0
        %v1128 = vmax.f32 %v1055, 0.0
        %v1129 = vmax.f32 %v944, 0.0
        %v1130 = vmax.f32 %v946, 0.0
        %v1131 = vmax.f32 %v1057, 0.0
        %v1132 = vmax.f32 %v1059, 0.0
        %v1133 = vmax.f32 %v950, 0.0
        %v1134 = vmax.f32 %v952, 0.0
        %v1135 = vmax.f32 %v1063, 0.0
        %v1136 = vmax.f32 %v1065, 0.0
        %v1137 = vmax.f32 %v954, 0.0
        %v1138 = vmax.f32 %v956, 0.0
        %v1139 = vmax.f32 %v1067, 0.0
        %v1140 = vmax.f32 %v1069, 0.0
        %v1141 = vmax.f32 %v960, 0.0
        %v1142 = vmax.f32 %v962, 0.0
        %v1143 = vmax.f32 %v1073, 0.0
        %v1144 = vmax.f32 %v1075, 0.0
        %v1145 = vmax.f32 %v964, 0.0
        %v1146 = vmax.f32 %v966, 0.0
        %v1147 = vmax.f32 %v1077, 0.0
        %v1148 = vmax.f32 %v1079, 0.0
        %v1149 = vmax.f32 %v970, 0.0
        %v1150 = vmax.f32 %v972, 0.0
        %v1151 = vmax.f32 %v1083, 0.0
        %v1152 = vmax.f32 %v1085, 0.0
        %v1153 = vmax.f32 %v974, 0.0
        %v1154 = vmax.f32 %v976, 0.0
        %v1155 = vmax.f32 %v1087, 0.0
        %v1156 = vmax.f32 %v1089, 0.0
        %v1157 = vmax.f32 %v980, 0.0
        %v1158 = vmax.f32 %v982, 0.0
        %v1159 = vmax.f32 %v1093, 0.0
        %v1160 = vmax.f32 %v1095, 0.0
        %v1161 = vmax.f32 %v984, 0.0
        %v1162 = vmax.f32 %v986, 0.0
        %v1163 = vmax.f32 %v1097, 0.0
        %v1164 = vmax.f32 %v1099, 0.0
        %v1165 = vpack.c.bf16 %v1105, %v1101
        %v1166 = vpack.c.bf16 %v1106, %v1102
        %v1167 = vpack.c.bf16 %v1107, %v1103
        %v1168 = vpack.c.bf16 %v1108, %v1104
        %v1169 = vpack.c.bf16 %v1113, %v1109
        %v1170 = vpack.c.bf16 %v1114, %v1110
        %v1171 = vpack.c.bf16 %v1115, %v1111
        %v1172 = vpack.c.bf16 %v1116, %v1112
        %v1173 = vpack.c.bf16 %v1121, %v1117
        %v1174 = vpack.c.bf16 %v1122, %v1118
        %v1175 = vpack.c.bf16 %v1123, %v1119
        %v1176 = vpack.c.bf16 %v1124, %v1120
        %v1177 = vpack.c.bf16 %v1129, %v1125
        %v1178 = vpack.c.bf16 %v1130, %v1126
        %v1179 = vpack.c.bf16 %v1131, %v1127
        %v1180 = vpack.c.bf16 %v1132, %v1128
        %v1181 = vpack.c.bf16 %v1137, %v1133
        %v1182 = vpack.c.bf16 %v1138, %v1134
        %v1183 = vpack.c.bf16 %v1139, %v1135
        %v1184 = vpack.c.bf16 %v1140, %v1136
        %v1185 = vpack.c.bf16 %v1145, %v1141
        %v1186 = vpack.c.bf16 %v1146, %v1142
        %v1187 = vpack.c.bf16 %v1147, %v1143
        %v1188 = vpack.c.bf16 %v1148, %v1144
        %v1189 = vpack.c.bf16 %v1153, %v1149
        %v1190 = vpack.c.bf16 %v1154, %v1150
        %v1191 = vpack.c.bf16 %v1155, %v1151
        %v1192 = vpack.c.bf16 %v1156, %v1152
        %v1193 = vpack.c.bf16 %v1161, %v1157
        %v1194 = vpack.c.bf16 %v1162, %v1158
        %v1195 = vpack.c.bf16 %v1163, %v1159
        %v1196 = vpack.c.bf16 %v1164, %v1160
        %1198 = vset.pattern.permute.xlu0 0
        %1199 = vperm.xlu0 %1198, %v542
        %v1200 = vpop.permute.xlu0 %1199
        %1203 = vset.pattern.permute.xlu0 0
        %1204 = vperm.xlu0 %1203, %v543
        %v1205 = vpop.permute.xlu0 %1204
        %1208 = vset.pattern.permute.xlu0 0
        %1209 = vperm.xlu0 %1208, %v544
        %v1210 = vpop.permute.xlu0 %1209
        %1213 = vset.pattern.permute.xlu0 0
        %1214 = vperm.xlu0 %1213, %v545
        %v1215 = vpop.permute.xlu0 %1214
        %1218 = vset.pattern.permute.xlu0 0
        %1219 = vperm.xlu0 %1218, %v546
        %v1220 = vpop.permute.xlu0 %1219
        %1223 = vset.pattern.permute.xlu0 0
        %1224 = vperm.xlu0 %1223, %v547
        %v1225 = vpop.permute.xlu0 %1224
        %1228 = vset.pattern.permute.xlu0 0
        %1229 = vperm.xlu0 %1228, %v548
        %v1230 = vpop.permute.xlu0 %1229
        %1233 = vset.pattern.permute.xlu0 0
        %1234 = vperm.xlu0 %1233, %v549
        %v1235 = vpop.permute.xlu0 %1234
        %v1245 = vunpack.c.l.b16 %v513
        %v1246 = vunpack.c.l.b16 %v514
        %v1247 = vunpack.c.l.b16 %v515
        %v1248 = vunpack.c.l.b16 %v516
        %v1249 = vunpack.c.l.b16 %v517
        %v1250 = vunpack.c.l.b16 %v518
        %v1251 = vunpack.c.l.b16 %v519
        %v1252 = vunpack.c.l.b16 %v520
        %v1253 = vpack.c.b16 %v1246, %v1245
        %v1254 = vpack.c.b16 %v1248, %v1247
        %v1255 = vpack.c.b16 %v1250, %v1249
        %v1256 = vpack.c.b16 %v1252, %v1251
        %1261 = vmatprep.subr.bf16.mxu0 %v1166
        %1262 = vmatpush1.bf16.msra.mxu0 %v1165
        %1263 = vmatprep.subr.bf16.mxu0 %v1170
        %1264 = vmatpush1.bf16.msra.mxu0 %v1169
        %1265 = vmatprep.subr.bf16.mxu0 %v1174
        %1266 = vmatpush1.bf16.msra.mxu0 %v1173
        %1267 = vmatprep.subr.bf16.mxu0 %v1178
        %1268 = vmatpush1.bf16.msra.mxu0 %v1177
        %1269 = vmatprep.subr.bf16.mxu0 %v1182
        %1270 = vmatpush1.bf16.msra.mxu0 %v1181
        %1271 = vmatprep.subr.bf16.mxu0 %v1186
        %1272 = vmatpush1.bf16.msra.mxu0 %v1185
        %1273 = vmatprep.subr.bf16.mxu0 %v1190
        %1274 = vmatpush1.bf16.msra.mxu0 %v1189
        %1275 = vmatprep.subr.bf16.mxu0 %v1194
        %1276 = vmatpush1.bf16.msra.mxu0 %v1193
        %1277 = vmatprep.subr.bf16.mxu0 0
        %1278 = vmatpush1.bf16.msra.mxu0 0
        %1279 = vmatprep.subr.bf16.mxu0 0
        %1280 = vmatpush1.bf16.msra.mxu0 0
        %1281 = vmatprep.subr.bf16.mxu0 0
        %1282 = vmatpush1.bf16.msra.mxu0 0
        %1283 = vmatprep.subr.bf16.mxu0 0
        %1284 = vmatpush1.bf16.msra.mxu0 0
        %1285 = vmatprep.subr.bf16.mxu0 0
        %1286 = vmatpush1.bf16.msra.mxu0 0
        %1287 = vmatprep.subr.bf16.mxu0 0
        %1288 = vmatpush1.bf16.msra.mxu0 0
        %1289 = vmatprep.subr.bf16.mxu0 0
        %1290 = vmatpush1.bf16.msra.mxu0 0
        %1291 = vmatprep.subr.bf16.mxu0 0
        %1292 = vmatpush1.bf16.msra.mxu0 0
        %1293 = vmatprep.mubr.bf16.mxu0 0
        %1294 = vmatmul.mubr.bf16.gmra.mrb[0].mxu0 %v1253
        %v1295 = vpop.f32.mrb[0].mxu0
        %v1296 = vadd.f32 %v1200, %v1295
        %v1297 = vpop.f32.mrb[0].mxu0
        %v1298 = vadd.f32 %v1200, %v1297
        %v1299 = vpop.f32.mrb[0].mxu0
        %v1300 = vadd.f32 %v1205, %v1299
        %v1301 = vpop.f32.mrb[0].mxu0
        %v1302 = vadd.f32 %v1205, %v1301
        %1303 = vmatprep.mubr.bf16.mxu0 0
        %1304 = vmatmul.mubr.bf16.gmra.mrb[0].mxu0 %v1254
        %v1305 = vpop.f32.mrb[0].mxu0
        %v1306 = vadd.f32 %v1210, %v1305
        %v1307 = vpop.f32.mrb[0].mxu0
        %v1308 = vadd.f32 %v1210, %v1307
        %v1309 = vpop.f32.mrb[0].mxu0
        %v1310 = vadd.f32 %v1215, %v1309
        %v1311 = vpop.f32.mrb[0].mxu0
        %v1312 = vadd.f32 %v1215, %v1311
        %1313 = vmatprep.mubr.bf16.mxu0 0
        %1314 = vmatmul.mubr.bf16.gmra.mrb[0].mxu0 %v1255
        %v1315 = vpop.f32.mrb[0].mxu0
        %v1316 = vadd.f32 %v1220, %v1315
        %v1317 = vpop.f32.mrb[0].mxu0
        %v1318 = vadd.f32 %v1220, %v1317
        %v1319 = vpop.f32.mrb[0].mxu0
        %v1320 = vadd.f32 %v1225, %v1319
        %v1321 = vpop.f32.mrb[0].mxu0
        %v1322 = vadd.f32 %v1225, %v1321
        %1323 = vmatprep.mubr.bf16.mxu0 0
        %1324 = vmatmul.mubr.bf16.gmra.mrb[0].mxu0 %v1256
        %v1325 = vpop.f32.mrb[0].mxu0
        %v1326 = vadd.f32 %v1230, %v1325
        %v1327 = vpop.f32.mrb[0].mxu0
        %v1328 = vadd.f32 %v1230, %v1327
        %v1329 = vpop.f32.mrb[0].mxu0
        %v1330 = vadd.f32 %v1235, %v1329
        %v1331 = vpop.f32.mrb[0].mxu0
        %v1332 = vadd.f32 %v1235, %v1331
        %1333 = vdwg.mxu0
        %1334 = vmatprep.subr.bf16.mxu0 %v1168
        %1335 = vmatpush1.bf16.msra.mxu0 %v1167
        %1336 = vmatprep.subr.bf16.mxu0 %v1172
        %1337 = vmatpush1.bf16.msra.mxu0 %v1171
        %1338 = vmatprep.subr.bf16.mxu0 %v1176
        %1339 = vmatpush1.bf16.msra.mxu0 %v1175
        %1340 = vmatprep.subr.bf16.mxu0 %v1180
        %1341 = vmatpush1.bf16.msra.mxu0 %v1179
        %1342 = vmatprep.subr.bf16.mxu0 %v1184
        %1343 = vmatpush1.bf16.msra.mxu0 %v1183
        %1344 = vmatprep.subr.bf16.mxu0 %v1188
        %1345 = vmatpush1.bf16.msra.mxu0 %v1187
        %1346 = vmatprep.subr.bf16.mxu0 %v1192
        %1347 = vmatpush1.bf16.msra.mxu0 %v1191
        %1348 = vmatprep.subr.bf16.mxu0 %v1196
        %1349 = vmatpush1.bf16.msra.mxu0 %v1195
        %1350 = vmatprep.subr.bf16.mxu0 0
        %1351 = vmatpush1.bf16.msra.mxu0 0
        %1352 = vmatprep.subr.bf16.mxu0 0
        %1353 = vmatpush1.bf16.msra.mxu0 0
        %1354 = vmatprep.subr.bf16.mxu0 0
        %1355 = vmatpush1.bf16.msra.mxu0 0
        %1356 = vmatprep.subr.bf16.mxu0 0
        %1357 = vmatpush1.bf16.msra.mxu0 0
        %1358 = vmatprep.subr.bf16.mxu0 0
        %1359 = vmatpush1.bf16.msra.mxu0 0
        %1360 = vmatprep.subr.bf16.mxu0 0
        %1361 = vmatpush1.bf16.msra.mxu0 0
        %1362 = vmatprep.subr.bf16.mxu0 0
        %1363 = vmatpush1.bf16.msra.mxu0 0
        %1364 = vmatprep.subr.bf16.mxu0 0
        %1365 = vmatpush1.bf16.msra.mxu0 0
        %1366 = vmatprep.mubr.bf16.mxu0 0
        %1367 = vmatmul.mubr.bf16.gmra.mrb[0].mxu0 %v1253
        %v1368 = vpop.f32.mrb[0].mxu0
        %v1369 = vadd.f32 %v1200, %v1368
        %v1370 = vpop.f32.mrb[0].mxu0
        %v1371 = vadd.f32 %v1200, %v1370
        %v1372 = vpop.f32.mrb[0].mxu0
        %v1373 = vadd.f32 %v1205, %v1372
        %v1374 = vpop.f32.mrb[0].mxu0
        %v1375 = vadd.f32 %v1205, %v1374
        %1376 = vmatprep.mubr.bf16.mxu0 0
        %1377 = vmatmul.mubr.bf16.gmra.mrb[0].mxu0 %v1254
        %v1378 = vpop.f32.mrb[0].mxu0
        %v1379 = vadd.f32 %v1210, %v1378
        %v1380 = vpop.f32.mrb[0].mxu0
        %v1381 = vadd.f32 %v1210, %v1380
        %v1382 = vpop.f32.mrb[0].mxu0
        %v1383 = vadd.f32 %v1215, %v1382
        %v1384 = vpop.f32.mrb[0].mxu0
        %v1385 = vadd.f32 %v1215, %v1384
        %1386 = vmatprep.mubr.bf16.mxu0 0
        %1387 = vmatmul.mubr.bf16.gmra.mrb[0].mxu0 %v1255
        %v1388 = vpop.f32.mrb[0].mxu0
        %v1389 = vadd.f32 %v1220, %v1388
        %v1390 = vpop.f32.mrb[0].mxu0
        %v1391 = vadd.f32 %v1220, %v1390
        %v1392 = vpop.f32.mrb[0].mxu0
        %v1393 = vadd.f32 %v1225, %v1392
        %v1394 = vpop.f32.mrb[0].mxu0
        %v1395 = vadd.f32 %v1225, %v1394
        %1396 = vmatprep.mubr.bf16.mxu0 0
        %1397 = vmatmul.mubr.bf16.gmra.mrb[0].mxu0 %v1256
        %v1398 = vpop.f32.mrb[0].mxu0
        %v1399 = vadd.f32 %v1230, %v1398
        %v1400 = vpop.f32.mrb[0].mxu0
        %v1401 = vadd.f32 %v1230, %v1400
        %v1402 = vpop.f32.mrb[0].mxu0
        %v1403 = vadd.f32 %v1235, %v1402
        %v1404 = vpop.f32.mrb[0].mxu0
        %v1405 = vadd.f32 %v1235, %v1404
        %1406 = vdwg.mxu0
        %v1407 = vmax.f32 %v1296, 0.0
        %v1408 = vmax.f32 %v1298, 0.0
        %v1409 = vmax.f32 %v1369, 0.0
        %v1410 = vmax.f32 %v1371, 0.0
        %v1411 = vmax.f32 %v1300, 0.0
        %v1412 = vmax.f32 %v1302, 0.0
        %v1413 = vmax.f32 %v1373, 0.0
        %v1414 = vmax.f32 %v1375, 0.0
        %v1415 = vmax.f32 %v1306, 0.0
        %v1416 = vmax.f32 %v1308, 0.0
        %v1417 = vmax.f32 %v1379, 0.0
        %v1418 = vmax.f32 %v1381, 0.0
        %v1419 = vmax.f32 %v1310, 0.0
        %v1420 = vmax.f32 %v1312, 0.0
        %v1421 = vmax.f32 %v1383, 0.0
        %v1422 = vmax.f32 %v1385, 0.0
        %v1423 = vmax.f32 %v1316, 0.0
        %v1424 = vmax.f32 %v1318, 0.0
        %v1425 = vmax.f32 %v1389, 0.0
        %v1426 = vmax.f32 %v1391, 0.0
        %v1427 = vmax.f32 %v1320, 0.0
        %v1428 = vmax.f32 %v1322, 0.0
        %v1429 = vmax.f32 %v1393, 0.0
        %v1430 = vmax.f32 %v1395, 0.0
        %v1431 = vmax.f32 %v1326, 0.0
        %v1432 = vmax.f32 %v1328, 0.0
        %v1433 = vmax.f32 %v1399, 0.0
        %v1434 = vmax.f32 %v1401, 0.0
        %v1435 = vmax.f32 %v1330, 0.0
        %v1436 = vmax.f32 %v1332, 0.0
        %v1437 = vmax.f32 %v1403, 0.0
        %v1438 = vmax.f32 %v1405, 0.0
        %v1439 = vpack.c.bf16 %v1411, %v1407
        %v1440 = vpack.c.bf16 %v1412, %v1408
        %v1441 = vpack.c.bf16 %v1413, %v1409
        %v1442 = vpack.c.bf16 %v1414, %v1410
        %v1443 = vpack.c.bf16 %v1419, %v1415
        %v1444 = vpack.c.bf16 %v1420, %v1416
        %v1445 = vpack.c.bf16 %v1421, %v1417
        %v1446 = vpack.c.bf16 %v1422, %v1418
        %v1447 = vpack.c.bf16 %v1427, %v1423
        %v1448 = vpack.c.bf16 %v1428, %v1424
        %v1449 = vpack.c.bf16 %v1429, %v1425
        %v1450 = vpack.c.bf16 %v1430, %v1426
        %v1451 = vpack.c.bf16 %v1435, %v1431
        %v1452 = vpack.c.bf16 %v1436, %v1432
        %v1453 = vpack.c.bf16 %v1437, %v1433
        %v1454 = vpack.c.bf16 %v1438, %v1434
        %1456 = vset.pattern.permute.xlu0 0
        %1457 = vperm.xlu0 %1456, %v550
        %v1458 = vpop.permute.xlu0 %1457
        %1461 = vset.pattern.permute.xlu0 0
        %1462 = vperm.xlu0 %1461, %v551
        %v1463 = vpop.permute.xlu0 %1462
        %1466 = vset.pattern.permute.xlu0 0
        %1467 = vperm.xlu0 %1466, %v552
        %v1468 = vpop.permute.xlu0 %1467
        %1471 = vset.pattern.permute.xlu0 0
        %1472 = vperm.xlu0 %1471, %v553
        %v1473 = vpop.permute.xlu0 %1472
        %v1479 = vunpack.c.l.b16 %v521
        %v1480 = vunpack.c.l.b16 %v522
        %v1481 = vunpack.c.l.b16 %v523
        %v1482 = vunpack.c.l.b16 %v524
        %v1483 = vpack.c.b16 %v1480, %v1479
        %v1484 = vpack.c.b16 %v1482, %v1481
        %vm1485 = vcmask 523264
        %v1487 = vsel %vm1485, %v1483, 0
        %v1490 = vsel %vm1485, %v1484, 0
        %1492 = vmatprep.subr.bf16.mxu0 %v1440
        %1493 = vmatpush1.bf16.msra.mxu0 %v1439
        %1494 = vmatprep.subr.bf16.mxu0 %v1444
        %1495 = vmatpush1.bf16.msra.mxu0 %v1443
        %1496 = vmatprep.subr.bf16.mxu0 %v1448
        %1497 = vmatpush1.bf16.msra.mxu0 %v1447
        %1498 = vmatprep.subr.bf16.mxu0 %v1452
        %1499 = vmatpush1.bf16.msra.mxu0 %v1451
        %1500 = vmatprep.subr.bf16.mxu0 0
        %1501 = vmatpush1.bf16.msra.mxu0 0
        %1502 = vmatprep.subr.bf16.mxu0 0
        %1503 = vmatpush1.bf16.msra.mxu0 0
        %1504 = vmatprep.subr.bf16.mxu0 0
        %1505 = vmatpush1.bf16.msra.mxu0 0
        %1506 = vmatprep.subr.bf16.mxu0 0
        %1507 = vmatpush1.bf16.msra.mxu0 0
        %1508 = vmatprep.subr.bf16.mxu0 0
        %1509 = vmatpush1.bf16.msra.mxu0 0
        %1510 = vmatprep.subr.bf16.mxu0 0
        %1511 = vmatpush1.bf16.msra.mxu0 0
        %1512 = vmatprep.subr.bf16.mxu0 0
        %1513 = vmatpush1.bf16.msra.mxu0 0
        %1514 = vmatprep.subr.bf16.mxu0 0
        %1515 = vmatpush1.bf16.msra.mxu0 0
        %1516 = vmatprep.subr.bf16.mxu0 0
        %1517 = vmatpush1.bf16.msra.mxu0 0
        %1518 = vmatprep.subr.bf16.mxu0 0
        %1519 = vmatpush1.bf16.msra.mxu0 0
        %1520 = vmatprep.subr.bf16.mxu0 0
        %1521 = vmatpush1.bf16.msra.mxu0 0
        %1522 = vmatprep.subr.bf16.mxu0 0
        %1523 = vmatpush1.bf16.msra.mxu0 0
        %1524 = vmatprep.mubr.bf16.mxu0 0
        %1525 = vmatmul.mubr.bf16.gmra.mrb[0].mxu0 %v1487
        %v1526 = vpop.f32.mrb[0].mxu0
        %v1527 = vadd.f32 %v1458, %v1526
        %v1528 = vpop.f32.mrb[0].mxu0
        %v1529 = vadd.f32 %v1458, %v1528
        %v1530 = vpop.f32.mrb[0].mxu0
        %v1531 = vadd.f32 %v1463, %v1530
        %v1532 = vpop.f32.mrb[0].mxu0
        %v1533 = vadd.f32 %v1463, %v1532
        %1534 = vmatprep.mubr.bf16.mxu0 0
        %1535 = vmatmul.mubr.bf16.gmra.mrb[0].mxu0 %v1490
        %v1536 = vpop.f32.mrb[0].mxu0
        %v1537 = vadd.f32 %v1468, %v1536
        %v1538 = vpop.f32.mrb[0].mxu0
        %v1539 = vadd.f32 %v1468, %v1538
        %v1540 = vpop.f32.mrb[0].mxu0
        %v1541 = vadd.f32 %v1473, %v1540
        %v1542 = vpop.f32.mrb[0].mxu0
        %v1543 = vadd.f32 %v1473, %v1542
        %1544 = vdwg.mxu0
        %1545 = vmatprep.subr.bf16.mxu0 %v1442
        %1546 = vmatpush1.bf16.msra.mxu0 %v1441
        %1547 = vmatprep.subr.bf16.mxu0 %v1446
        %1548 = vmatpush1.bf16.msra.mxu0 %v1445
        %1549 = vmatprep.subr.bf16.mxu0 %v1450
        %1550 = vmatpush1.bf16.msra.mxu0 %v1449
        %1551 = vmatprep.subr.bf16.mxu0 %v1454
        %1552 = vmatpush1.bf16.msra.mxu0 %v1453
        %1553 = vmatprep.subr.bf16.mxu0 0
        %1554 = vmatpush1.bf16.msra.mxu0 0
        %1555 = vmatprep.subr.bf16.mxu0 0
        %1556 = vmatpush1.bf16.msra.mxu0 0
        %1557 = vmatprep.subr.bf16.mxu0 0
        %1558 = vmatpush1.bf16.msra.mxu0 0
        %1559 = vmatprep.subr.bf16.mxu0 0
        %1560 = vmatpush1.bf16.msra.mxu0 0
        %1561 = vmatprep.subr.bf16.mxu0 0
        %1562 = vmatpush1.bf16.msra.mxu0 0
        %1563 = vmatprep.subr.bf16.mxu0 0
        %1564 = vmatpush1.bf16.msra.mxu0 0
        %1565 = vmatprep.subr.bf16.mxu0 0
        %1566 = vmatpush1.bf16.msra.mxu0 0
        %1567 = vmatprep.subr.bf16.mxu0 0
        %1568 = vmatpush1.bf16.msra.mxu0 0
        %1569 = vmatprep.subr.bf16.mxu0 0
        %1570 = vmatpush1.bf16.msra.mxu0 0
        %1571 = vmatprep.subr.bf16.mxu0 0
        %1572 = vmatpush1.bf16.msra.mxu0 0
        %1573 = vmatprep.subr.bf16.mxu0 0
        %1574 = vmatpush1.bf16.msra.mxu0 0
        %1575 = vmatprep.subr.bf16.mxu0 0
        %1576 = vmatpush1.bf16.msra.mxu0 0
        %1577 = vmatprep.mubr.bf16.mxu0 0
        %1578 = vmatmul.mubr.bf16.gmra.mrb[0].mxu0 %v1487
        %v1579 = vpop.f32.mrb[0].mxu0
        %v1580 = vadd.f32 %v1458, %v1579
        %v1581 = vpop.f32.mrb[0].mxu0
        %v1582 = vadd.f32 %v1458, %v1581
        %v1583 = vpop.f32.mrb[0].mxu0
        %v1584 = vadd.f32 %v1463, %v1583
        %v1585 = vpop.f32.mrb[0].mxu0
        %v1586 = vadd.f32 %v1463, %v1585
        %1587 = vmatprep.mubr.bf16.mxu0 0
        %1588 = vmatmul.mubr.bf16.gmra.mrb[0].mxu0 %v1490
        %v1589 = vpop.f32.mrb[0].mxu0
        %v1590 = vadd.f32 %v1468, %v1589
        %v1591 = vpop.f32.mrb[0].mxu0
        %v1592 = vadd.f32 %v1468, %v1591
        %v1593 = vpop.f32.mrb[0].mxu0
        %v1594 = vadd.f32 %v1473, %v1593
        %v1595 = vpop.f32.mrb[0].mxu0
        %v1596 = vadd.f32 %v1473, %v1595
        %1597 = vdwg.mxu0
        %v1598 = vmax.f32 %v1527, 0.0
        %v1599 = vmax.f32 %v1529, 0.0
        %v1600 = vmax.f32 %v1580, 0.0
        %v1601 = vmax.f32 %v1582, 0.0
        %v1602 = vmax.f32 %v1531, 0.0
        %v1603 = vmax.f32 %v1533, 0.0
        %v1604 = vmax.f32 %v1584, 0.0
        %v1605 = vmax.f32 %v1586, 0.0
        %v1606 = vmax.f32 %v1537, 0.0
        %v1607 = vmax.f32 %v1539, 0.0
        %v1608 = vmax.f32 %v1590, 0.0
        %v1609 = vmax.f32 %v1592, 0.0
        %v1610 = vmax.f32 %v1541, 0.0
        %v1611 = vmax.f32 %v1543, 0.0
        %v1612 = vmax.f32 %v1594, 0.0
        %v1613 = vmax.f32 %v1596, 0.0
        %v1614 = vpack.c.bf16 %v1602, %v1598
        %v1615 = vpack.c.bf16 %v1603, %v1599
        %v1616 = vpack.c.bf16 %v1604, %v1600
        %v1617 = vpack.c.bf16 %v1605, %v1601
        %v1618 = vpack.c.bf16 %v1610, %v1606
        %v1619 = vpack.c.bf16 %v1611, %v1607
        %v1620 = vpack.c.bf16 %v1612, %v1608
        %v1621 = vpack.c.bf16 %v1613, %v1609
        %1623 = vset.pattern.permute.xlu0 0
        %1624 = vperm.xlu0 %1623, %v554
        %v1625 = vpop.permute.xlu0 %1624
        %vm1627 = vcmask 261120
        %v1629 = vsel %vm1627, %v525, 0
        %1631 = vmatprep.subr.bf16.mxu0 %v1615
        %1632 = vmatpush1.bf16.msra.mxu0 %v1614
        %1633 = vmatprep.subr.bf16.mxu0 %v1619
        %1634 = vmatpush1.bf16.msra.mxu0 %v1618
        %1635 = vmatprep.subr.bf16.mxu0 0
        %1636 = vmatpush1.bf16.msra.mxu0 0
        %1637 = vmatprep.subr.bf16.mxu0 0
        %1638 = vmatpush1.bf16.msra.mxu0 0
        %1639 = vmatprep.subr.bf16.mxu0 0
        %1640 = vmatpush1.bf16.msra.mxu0 0
        %1641 = vmatprep.subr.bf16.mxu0 0
        %1642 = vmatpush1.bf16.msra.mxu0 0
        %1643 = vmatprep.subr.bf16.mxu0 0
        %1644 = vmatpush1.bf16.msra.mxu0 0
        %1645 = vmatprep.subr.bf16.mxu0 0
        %1646 = vmatpush1.bf16.msra.mxu0 0
        %1647 = vmatprep.subr.bf16.mxu0 0
        %1648 = vmatpush1.bf16.msra.mxu0 0
        %1649 = vmatprep.subr.bf16.mxu0 0
        %1650 = vmatpush1.bf16.msra.mxu0 0
        %1651 = vmatprep.subr.bf16.mxu0 0
        %1652 = vmatpush1.bf16.msra.mxu0 0
        %1653 = vmatprep.subr.bf16.mxu0 0
        %1654 = vmatpush1.bf16.msra.mxu0 0
        %1655 = vmatprep.subr.bf16.mxu0 0
        %1656 = vmatpush1.bf16.msra.mxu0 0
        %1657 = vmatprep.subr.bf16.mxu0 0
        %1658 = vmatpush1.bf16.msra.mxu0 0
        %1659 = vmatprep.subr.bf16.mxu0 0
        %1660 = vmatpush1.bf16.msra.mxu0 0
        %1661 = vmatprep.subr.bf16.mxu0 0
        %1662 = vmatpush1.bf16.msra.mxu0 0
        %1663 = vmatprep.mubr.bf16.mxu0 0
        %1664 = vmatmul.mubr.bf16.gmra.mrb[0].mxu0 %v1629
        %v1665 = vpop.f32.mrb[0].mxu0
        %v1666 = vadd.f32 %v1625, %v1665
        %v1667 = vpop.f32.mrb[0].mxu0
        %v1668 = vadd.f32 %v1625, %v1667
        %v1669 = vpop.f32.mrb[0].mxu0
        %v1670 = vpop.f32.mrb[0].mxu0
        %1671 = vdwg.mxu0
        %1672 = vmatprep.subr.bf16.mxu0 %v1617
        %1673 = vmatpush1.bf16.msra.mxu0 %v1616
        %1674 = vmatprep.subr.bf16.mxu0 %v1621
        %1675 = vmatpush1.bf16.msra.mxu0 %v1620
        %1676 = vmatprep.subr.bf16.mxu0 0
        %1677 = vmatpush1.bf16.msra.mxu0 0
        %1678 = vmatprep.subr.bf16.mxu0 0
        %1679 = vmatpush1.bf16.msra.mxu0 0
        %1680 = vmatprep.subr.bf16.mxu0 0
        %1681 = vmatpush1.bf16.msra.mxu0 0
        %1682 = vmatprep.subr.bf16.mxu0 0
        %1683 = vmatpush1.bf16.msra.mxu0 0
        %1684 = vmatprep.subr.bf16.mxu0 0
        %1685 = vmatpush1.bf16.msra.mxu0 0
        %1686 = vmatprep.subr.bf16.mxu0 0
        %1687 = vmatpush1.bf16.msra.mxu0 0
        %1688 = vmatprep.subr.bf16.mxu0 0
        %1689 = vmatpush1.bf16.msra.mxu0 0
        %1690 = vmatprep.subr.bf16.mxu0 0
        %1691 = vmatpush1.bf16.msra.mxu0 0
        %1692 = vmatprep.subr.bf16.mxu0 0
        %1693 = vmatpush1.bf16.msra.mxu0 0
        %1694 = vmatprep.subr.bf16.mxu0 0
        %1695 = vmatpush1.bf16.msra.mxu0 0
        %1696 = vmatprep.subr.bf16.mxu0 0
        %1697 = vmatpush1.bf16.msra.mxu0 0
        %1698 = vmatprep.subr.bf16.mxu0 0
        %1699 = vmatpush1.bf16.msra.mxu0 0
        %1700 = vmatprep.subr.bf16.mxu0 0
        %1701 = vmatpush1.bf16.msra.mxu0 0
        %1702 = vmatprep.subr.bf16.mxu0 0
        %1703 = vmatpush1.bf16.msra.mxu0 0
        %1704 = vmatprep.mubr.bf16.mxu0 0
        %1705 = vmatmul.mubr.bf16.gmra.mrb[0].mxu0 %v1629
        %v1706 = vpop.f32.mrb[0].mxu0
        %v1707 = vadd.f32 %v1625, %v1706
        %v1708 = vpop.f32.mrb[0].mxu0
        %v1709 = vadd.f32 %v1625, %v1708
        %v1710 = vpop.f32.mrb[0].mxu0
        %v1711 = vpop.f32.mrb[0].mxu0
        %1712 = vdwg.mxu0
        %v1713 = vtanh.pop %v1666
        %v1714 = vtanh.pop %v1668
        %v1715 = vtanh.pop %v1707
        %v1716 = vtanh.pop %v1709
        %v1721 = vcombine.low %v1713, %v1714
        %v1722 = vcombine.low %v1715, %v1716
        %1725 = vst [vmem:[%s491] sm:$0x77] %v1721
        %1726 = vst [vmem:[%s491 + $0x8] sm:$0x77] %v1722
        %s1727 = scalar_lea.vmem %s460, 256 [#allocation2]
        %v1728 = vld [vmem:[%s1727] sm:$0xff]
        %v1729 = vld [vmem:[%s1727 + $0x8] sm:$0xff]
        %v1730 = vld [vmem:[%s1727 + $0x10] sm:$0xff]
        %v1731 = vld [vmem:[%s1727 + $0x18] sm:$0xff]
        %v1732 = vld [vmem:[%s1727 + $0x20] sm:$0xff]
        %v1733 = vld [vmem:[%s1727 + $0x28] sm:$0xff]
        %v1734 = vld [vmem:[%s1727 + $0x30] sm:$0xff]
        %v1735 = vld [vmem:[%s1727 + $0x38] sm:$0xff]
        %v1736 = vld [vmem:[%s1727 + $0x40] sm:$0xff]
        %v1737 = vld [vmem:[%s1727 + $0x48] sm:$0xff]
        %v1738 = vld [vmem:[%s1727 + $0x50] sm:$0xff]
        %v1739 = vld [vmem:[%s1727 + $0x58] sm:$0xff]
        %v1740 = vld [vmem:[%s1727 + $0x60] sm:$0xff]
        %v1741 = vld [vmem:[%s1727 + $0x68] sm:$0xff]
        %v1742 = vld [vmem:[%s1727 + $0x70] sm:$0xff]
        %v1743 = vld [vmem:[%s1727 + $0x78] sm:$0xff]
        %v1744 = vld [vmem:[%s1727 + $0x80] sm:$0xff]
        %v1745 = vld [vmem:[%s1727 + $0x88] sm:$0xff]
        %v1746 = vld [vmem:[%s1727 + $0x90] sm:$0xff]
        %v1747 = vld [vmem:[%s1727 + $0x98] sm:$0xff]
        %v1748 = vld [vmem:[%s1727 + $0xa0] sm:$0xff]
        %v1749 = vld [vmem:[%s1727 + $0xa8] sm:$0xff]
        %v1750 = vld [vmem:[%s1727 + $0xb0] sm:$0xff]
        %v1751 = vld [vmem:[%s1727 + $0xb8] sm:$0xff]
        %v1752 = vld [vmem:[%s1727 + $0xc0] sm:$0xff]
        %v1753 = vld [vmem:[%s1727 + $0xc8] sm:$0xff]
        %v1754 = vld [vmem:[%s1727 + $0xd0] sm:$0xff]
        %v1755 = vld [vmem:[%s1727 + $0xd8] sm:$0xff]
        %v1756 = vld [vmem:[%s1727 + $0xe0] sm:$0xff]
        %v1757 = vld [vmem:[%s1727 + $0xe8] sm:$0xff]
        %v1758 = vld [vmem:[%s1727 + $0xf0] sm:$0xff]
        %v1759 = vld [vmem:[%s1727 + $0xf8] sm:$0xff]
        %v1792 = vunpack.c.l.b16 %v1728
        %v1793 = vunpack.c.h.b16 %v1728
        %v1794 = vunpack.c.l.b16 %v1729
        %v1795 = vunpack.c.h.b16 %v1729
        %v1796 = vunpack.c.l.b16 %v1730
        %v1797 = vunpack.c.h.b16 %v1730
        %v1798 = vunpack.c.l.b16 %v1731
        %v1799 = vunpack.c.h.b16 %v1731
        %v1800 = vunpack.c.l.b16 %v1732
        %v1801 = vunpack.c.h.b16 %v1732
        %v1802 = vunpack.c.l.b16 %v1733
        %v1803 = vunpack.c.h.b16 %v1733
        %v1804 = vunpack.c.l.b16 %v1734
        %v1805 = vunpack.c.h.b16 %v1734
        %v1806 = vunpack.c.l.b16 %v1735
        %v1807 = vunpack.c.h.b16 %v1735
        %v1808 = vunpack.c.l.b16 %v1736
        %v1809 = vunpack.c.h.b16 %v1736
        %v1810 = vunpack.c.l.b16 %v1737
        %v1811 = vunpack.c.h.b16 %v1737
        %v1812 = vunpack.c.l.b16 %v1738
        %v1813 = vunpack.c.h.b16 %v1738
        %v1814 = vunpack.c.l.b16 %v1739
        %v1815 = vunpack.c.h.b16 %v1739
        %v1816 = vunpack.c.l.b16 %v1740
        %v1817 = vunpack.c.h.b16 %v1740
        %v1818 = vunpack.c.l.b16 %v1741
        %v1819 = vunpack.c.h.b16 %v1741
        %v1820 = vunpack.c.l.b16 %v1742
        %v1821 = vunpack.c.h.b16 %v1742
        %v1822 = vunpack.c.l.b16 %v1743
        %v1823 = vunpack.c.h.b16 %v1743
        %v1824 = vunpack.c.l.b16 %v1744
        %v1825 = vunpack.c.h.b16 %v1744
        %v1826 = vunpack.c.l.b16 %v1745
        %v1827 = vunpack.c.h.b16 %v1745
        %v1828 = vunpack.c.l.b16 %v1746
        %v1829 = vunpack.c.h.b16 %v1746
        %v1830 = vunpack.c.l.b16 %v1747
        %v1831 = vunpack.c.h.b16 %v1747
        %v1832 = vunpack.c.l.b16 %v1748
        %v1833 = vunpack.c.h.b16 %v1748
        %v1834 = vunpack.c.l.b16 %v1749
        %v1835 = vunpack.c.h.b16 %v1749
        %v1836 = vunpack.c.l.b16 %v1750
        %v1837 = vunpack.c.h.b16 %v1750
        %v1838 = vunpack.c.l.b16 %v1751
        %v1839 = vunpack.c.h.b16 %v1751
        %v1840 = vunpack.c.l.b16 %v1752
        %v1841 = vunpack.c.h.b16 %v1752
        %v1842 = vunpack.c.l.b16 %v1753
        %v1843 = vunpack.c.h.b16 %v1753
        %v1844 = vunpack.c.l.b16 %v1754
        %v1845 = vunpack.c.h.b16 %v1754
        %v1846 = vunpack.c.l.b16 %v1755
        %v1847 = vunpack.c.h.b16 %v1755
        %v1848 = vunpack.c.l.b16 %v1756
        %v1849 = vunpack.c.h.b16 %v1756
        %v1850 = vunpack.c.l.b16 %v1757
        %v1851 = vunpack.c.h.b16 %v1757
        %v1852 = vunpack.c.l.b16 %v1758
        %v1853 = vunpack.c.h.b16 %v1758
        %v1854 = vunpack.c.l.b16 %v1759
        %v1855 = vunpack.c.h.b16 %v1759
        %v1856 = vpack.c.b16 %v1796, %v1792
        %v1857 = vpack.c.b16 %v1797, %v1793
        %v1858 = vpack.c.b16 %v1798, %v1794
        %v1859 = vpack.c.b16 %v1799, %v1795
        %v1860 = vpack.c.b16 %v1804, %v1800
        %v1861 = vpack.c.b16 %v1805, %v1801
        %v1862 = vpack.c.b16 %v1806, %v1802
        %v1863 = vpack.c.b16 %v1807, %v1803
        %v1864 = vpack.c.b16 %v1812, %v1808
        %v1865 = vpack.c.b16 %v1813, %v1809
        %v1866 = vpack.c.b16 %v1814, %v1810
        %v1867 = vpack.c.b16 %v1815, %v1811
        %v1868 = vpack.c.b16 %v1820, %v1816
        %v1869 = vpack.c.b16 %v1821, %v1817
        %v1870 = vpack.c.b16 %v1822, %v1818
        %v1871 = vpack.c.b16 %v1823, %v1819
        %v1872 = vpack.c.b16 %v1828, %v1824
        %v1873 = vpack.c.b16 %v1829, %v1825
        %v1874 = vpack.c.b16 %v1830, %v1826
        %v1875 = vpack.c.b16 %v1831, %v1827
        %v1876 = vpack.c.b16 %v1836, %v1832
        %v1877 = vpack.c.b16 %v1837, %v1833
        %v1878 = vpack.c.b16 %v1838, %v1834
        %v1879 = vpack.c.b16 %v1839, %v1835
        %v1880 = vpack.c.b16 %v1844, %v1840
        %v1881 = vpack.c.b16 %v1845, %v1841
        %v1882 = vpack.c.b16 %v1846, %v1842
        %v1883 = vpack.c.b16 %v1847, %v1843
        %v1884 = vpack.c.b16 %v1852, %v1848
        %v1885 = vpack.c.b16 %v1853, %v1849
        %v1886 = vpack.c.b16 %v1854, %v1850
        %v1887 = vpack.c.b16 %v1855, %v1851
        %1920 = vmatprep.subr.bf16.mxu0 %v1857
        %1921 = vmatpush1.bf16.msra.mxu0 %v1856
        %1922 = vmatprep.subr.bf16.mxu0 %v1861
        %1923 = vmatpush1.bf16.msra.mxu0 %v1860
        %1924 = vmatprep.subr.bf16.mxu0 %v1865
        %1925 = vmatpush1.bf16.msra.mxu0 %v1864
        %1926 = vmatprep.subr.bf16.mxu0 %v1869
        %1927 = vmatpush1.bf16.msra.mxu0 %v1868
        %1928 = vmatprep.subr.bf16.mxu0 %v1873
        %1929 = vmatpush1.bf16.msra.mxu0 %v1872
        %1930 = vmatprep.subr.bf16.mxu0 %v1877
        %1931 = vmatpush1.bf16.msra.mxu0 %v1876
        %1932 = vmatprep.subr.bf16.mxu0 %v1881
        %1933 = vmatpush1.bf16.msra.mxu0 %v1880
        %1934 = vmatprep.subr.bf16.mxu0 %v1885
        %1935 = vmatpush1.bf16.msra.mxu0 %v1884
        %1936 = vmatprep.subr.bf16.mxu0 0
        %1937 = vmatpush1.bf16.msra.mxu0 0
        %1938 = vmatprep.subr.bf16.mxu0 0
        %1939 = vmatpush1.bf16.msra.mxu0 0
        %1940 = vmatprep.subr.bf16.mxu0 0
        %1941 = vmatpush1.bf16.msra.mxu0 0
        %1942 = vmatprep.subr.bf16.mxu0 0
        %1943 = vmatpush1.bf16.msra.mxu0 0
        %1944 = vmatprep.subr.bf16.mxu0 0
        %1945 = vmatpush1.bf16.msra.mxu0 0
        %1946 = vmatprep.subr.bf16.mxu0 0
        %1947 = vmatpush1.bf16.msra.mxu0 0
        %1948 = vmatprep.subr.bf16.mxu0 0
        %1949 = vmatpush1.bf16.msra.mxu0 0
        %1950 = vmatprep.subr.bf16.mxu0 0
        %1951 = vmatpush1.bf16.msra.mxu0 0
        %1952 = vmatprep.mubr.bf16.mxu0 0
        %1953 = vmatmul.mubr.bf16.gmra.mrb[0].mxu0 %v699
        %v1954 = vpop.f32.mrb[0].mxu0
        %v1955 = vadd.f32 %v590, %v1954
        %v1956 = vpop.f32.mrb[0].mxu0
        %v1957 = vadd.f32 %v590, %v1956
        %v1958 = vpop.f32.mrb[0].mxu0
        %v1959 = vadd.f32 %v595, %v1958
        %v1960 = vpop.f32.mrb[0].mxu0
        %v1961 = vadd.f32 %v595, %v1960
        %1962 = vmatprep.mubr.bf16.mxu0 0
        %1963 = vmatmul.mubr.bf16.gmra.mrb[0].mxu0 %v700
        %v1964 = vpop.f32.mrb[0].mxu0
        %v1965 = vadd.f32 %v600, %v1964
        %v1966 = vpop.f32.mrb[0].mxu0
        %v1967 = vadd.f32 %v600, %v1966
        %v1968 = vpop.f32.mrb[0].mxu0
        %v1969 = vadd.f32 %v605, %v1968
        %v1970 = vpop.f32.mrb[0].mxu0
        %v1971 = vadd.f32 %v605, %v1970
        %1972 = vmatprep.mubr.bf16.mxu0 0
        %1973 = vmatmul.mubr.bf16.gmra.mrb[0].mxu0 %v701
        %v1974 = vpop.f32.mrb[0].mxu0
        %v1975 = vadd.f32 %v610, %v1974
        %v1976 = vpop.f32.mrb[0].mxu0
        %v1977 = vadd.f32 %v610, %v1976
        %v1978 = vpop.f32.mrb[0].mxu0
        %v1979 = vadd.f32 %v615, %v1978
        %v1980 = vpop.f32.mrb[0].mxu0
        %v1981 = vadd.f32 %v615, %v1980
        %1982 = vmatprep.mubr.bf16.mxu0 0
        %1983 = vmatmul.mubr.bf16.gmra.mrb[0].mxu0 %v702
        %v1984 = vpop.f32.mrb[0].mxu0
        %v1985 = vadd.f32 %v620, %v1984
        %v1986 = vpop.f32.mrb[0].mxu0
        %v1987 = vadd.f32 %v620, %v1986
        %v1988 = vpop.f32.mrb[0].mxu0
        %v1989 = vadd.f32 %v625, %v1988
        %v1990 = vpop.f32.mrb[0].mxu0
        %v1991 = vadd.f32 %v625, %v1990
        %1992 = vmatprep.mubr.bf16.mxu0 0
        %1993 = vmatmul.mubr.bf16.gmra.mrb[0].mxu0 %v703
        %v1994 = vpop.f32.mrb[0].mxu0
        %v1995 = vadd.f32 %v630, %v1994
        %v1996 = vpop.f32.mrb[0].mxu0
        %v1997 = vadd.f32 %v630, %v1996
        %v1998 = vpop.f32.mrb[0].mxu0
        %v1999 = vadd.f32 %v635, %v1998
        %v2000 = vpop.f32.mrb[0].mxu0
        %v2001 = vadd.f32 %v635, %v2000
        %2002 = vmatprep.mubr.bf16.mxu0 0
        %2003 = vmatmul.mubr.bf16.gmra.mrb[0].mxu0 %v704
        %v2004 = vpop.f32.mrb[0].mxu0
        %v2005 = vadd.f32 %v640, %v2004
        %v2006 = vpop.f32.mrb[0].mxu0
        %v2007 = vadd.f32 %v640, %v2006
        %v2008 = vpop.f32.mrb[0].mxu0
        %v2009 = vadd.f32 %v645, %v2008
        %v2010 = vpop.f32.mrb[0].mxu0
        %v2011 = vadd.f32 %v645, %v2010
        %2012 = vmatprep.mubr.bf16.mxu0 0
        %2013 = vmatmul.mubr.bf16.gmra.mrb[0].mxu0 %v705
        %v2014 = vpop.f32.mrb[0].mxu0
        %v2015 = vadd.f32 %v650, %v2014
        %v2016 = vpop.f32.mrb[0].mxu0
        %v2017 = vadd.f32 %v650, %v2016
        %v2018 = vpop.f32.mrb[0].mxu0
        %v2019 = vadd.f32 %v655, %v2018
        %v2020 = vpop.f32.mrb[0].mxu0
        %v2021 = vadd.f32 %v655, %v2020
        %2022 = vmatprep.mubr.bf16.mxu0 0
        %2023 = vmatmul.mubr.bf16.gmra.mrb[0].mxu0 %v706
        %v2024 = vpop.f32.mrb[0].mxu0
        %v2025 = vadd.f32 %v660, %v2024
        %v2026 = vpop.f32.mrb[0].mxu0
        %v2027 = vadd.f32 %v660, %v2026
        %v2028 = vpop.f32.mrb[0].mxu0
        %v2029 = vadd.f32 %v665, %v2028
        %v2030 = vpop.f32.mrb[0].mxu0
        %v2031 = vadd.f32 %v665, %v2030
        %2032 = vdwg.mxu0
        %2033 = vmatprep.subr.bf16.mxu0 %v1859
        %2034 = vmatpush1.bf16.msra.mxu0 %v1858
        %2035 = vmatprep.subr.bf16.mxu0 %v1863
        %2036 = vmatpush1.bf16.msra.mxu0 %v1862
        %2037 = vmatprep.subr.bf16.mxu0 %v1867
        %2038 = vmatpush1.bf16.msra.mxu0 %v1866
        %2039 = vmatprep.subr.bf16.mxu0 %v1871
        %2040 = vmatpush1.bf16.msra.mxu0 %v1870
        %2041 = vmatprep.subr.bf16.mxu0 %v1875
        %2042 = vmatpush1.bf16.msra.mxu0 %v1874
        %2043 = vmatprep.subr.bf16.mxu0 %v1879
        %2044 = vmatpush1.bf16.msra.mxu0 %v1878
        %2045 = vmatprep.subr.bf16.mxu0 %v1883
        %2046 = vmatpush1.bf16.msra.mxu0 %v1882
        %2047 = vmatprep.subr.bf16.mxu0 %v1887
        %2048 = vmatpush1.bf16.msra.mxu0 %v1886
        %2049 = vmatprep.subr.bf16.mxu0 0
        %2050 = vmatpush1.bf16.msra.mxu0 0
        %2051 = vmatprep.subr.bf16.mxu0 0
        %2052 = vmatpush1.bf16.msra.mxu0 0
        %2053 = vmatprep.subr.bf16.mxu0 0
        %2054 = vmatpush1.bf16.msra.mxu0 0
        %2055 = vmatprep.subr.bf16.mxu0 0
        %2056 = vmatpush1.bf16.msra.mxu0 0
        %2057 = vmatprep.subr.bf16.mxu0 0
        %2058 = vmatpush1.bf16.msra.mxu0 0
        %2059 = vmatprep.subr.bf16.mxu0 0
        %2060 = vmatpush1.bf16.msra.mxu0 0
        %2061 = vmatprep.subr.bf16.mxu0 0
        %2062 = vmatpush1.bf16.msra.mxu0 0
        %2063 = vmatprep.subr.bf16.mxu0 0
        %2064 = vmatpush1.bf16.msra.mxu0 0
        %2065 = vmatprep.mubr.bf16.mxu0 0
        %2066 = vmatmul.mubr.bf16.gmra.mrb[0].mxu0 %v699
        %v2067 = vpop.f32.mrb[0].mxu0
        %v2068 = vadd.f32 %v590, %v2067
        %v2069 = vpop.f32.mrb[0].mxu0
        %v2070 = vadd.f32 %v590, %v2069
        %v2071 = vpop.f32.mrb[0].mxu0
        %v2072 = vadd.f32 %v595, %v2071
        %v2073 = vpop.f32.mrb[0].mxu0
        %v2074 = vadd.f32 %v595, %v2073
        %2075 = vmatprep.mubr.bf16.mxu0 0
        %2076 = vmatmul.mubr.bf16.gmra.mrb[0].mxu0 %v700
        %v2077 = vpop.f32.mrb[0].mxu0
        %v2078 = vadd.f32 %v600, %v2077
        %v2079 = vpop.f32.mrb[0].mxu0
        %v2080 = vadd.f32 %v600, %v2079
        %v2081 = vpop.f32.mrb[0].mxu0
        %v2082 = vadd.f32 %v605, %v2081
        %v2083 = vpop.f32.mrb[0].mxu0
        %v2084 = vadd.f32 %v605, %v2083
        %2085 = vmatprep.mubr.bf16.mxu0 0
        %2086 = vmatmul.mubr.bf16.gmra.mrb[0].mxu0 %v701
        %v2087 = vpop.f32.mrb[0].mxu0
        %v2088 = vadd.f32 %v610, %v2087
        %v2089 = vpop.f32.mrb[0].mxu0
        %v2090 = vadd.f32 %v610, %v2089
        %v2091 = vpop.f32.mrb[0].mxu0
        %v2092 = vadd.f32 %v615, %v2091
        %v2093 = vpop.f32.mrb[0].mxu0
        %v2094 = vadd.f32 %v615, %v2093
        %2095 = vmatprep.mubr.bf16.mxu0 0
        %2096 = vmatmul.mubr.bf16.gmra.mrb[0].mxu0 %v702
        %v2097 = vpop.f32.mrb[0].mxu0
        %v2098 = vadd.f32 %v620, %v2097
        %v2099 = vpop.f32.mrb[0].mxu0
        %v2100 = vadd.f32 %v620, %v2099
        %v2101 = vpop.f32.mrb[0].mxu0
        %v2102 = vadd.f32 %v625, %v2101
        %v2103 = vpop.f32.mrb[0].mxu0
        %v2104 = vadd.f32 %v625, %v2103
        %2105 = vmatprep.mubr.bf16.mxu0 0
        %2106 = vmatmul.mubr.bf16.gmra.mrb[0].mxu0 %v703
        %v2107 = vpop.f32.mrb[0].mxu0
        %v2108 = vadd.f32 %v630, %v2107
        %v2109 = vpop.f32.mrb[0].mxu0
        %v2110 = vadd.f32 %v630, %v2109
        %v2111 = vpop.f32.mrb[0].mxu0
        %v2112 = vadd.f32 %v635, %v2111
        %v2113 = vpop.f32.mrb[0].mxu0
        %v2114 = vadd.f32 %v635, %v2113
        %2115 = vmatprep.mubr.bf16.mxu0 0
        %2116 = vmatmul.mubr.bf16.gmra.mrb[0].mxu0 %v704
        %v2117 = vpop.f32.mrb[0].mxu0
        %v2118 = vadd.f32 %v640, %v2117
        %v2119 = vpop.f32.mrb[0].mxu0
        %v2120 = vadd.f32 %v640, %v2119
        %v2121 = vpop.f32.mrb[0].mxu0
        %v2122 = vadd.f32 %v645, %v2121
        %v2123 = vpop.f32.mrb[0].mxu0
        %v2124 = vadd.f32 %v645, %v2123
        %2125 = vmatprep.mubr.bf16.mxu0 0
        %2126 = vmatmul.mubr.bf16.gmra.mrb[0].mxu0 %v705
        %v2127 = vpop.f32.mrb[0].mxu0
        %v2128 = vadd.f32 %v650, %v2127
        %v2129 = vpop.f32.mrb[0].mxu0
        %v2130 = vadd.f32 %v650, %v2129
        %v2131 = vpop.f32.mrb[0].mxu0
        %v2132 = vadd.f32 %v655, %v2131
        %v2133 = vpop.f32.mrb[0].mxu0
        %v2134 = vadd.f32 %v655, %v2133
        %2135 = vmatprep.mubr.bf16.mxu0 0
        %2136 = vmatmul.mubr.bf16.gmra.mrb[0].mxu0 %v706
        %v2137 = vpop.f32.mrb[0].mxu0
        %v2138 = vadd.f32 %v660, %v2137
        %v2139 = vpop.f32.mrb[0].mxu0
        %v2140 = vadd.f32 %v660, %v2139
        %v2141 = vpop.f32.mrb[0].mxu0
        %v2142 = vadd.f32 %v665, %v2141
        %v2143 = vpop.f32.mrb[0].mxu0
        %v2144 = vadd.f32 %v665, %v2143
        %2145 = vdwg.mxu0
        %v2146 = vmax.f32 %v1955, 0.0
        %v2147 = vmax.f32 %v1957, 0.0
        %v2148 = vmax.f32 %v2068, 0.0
        %v2149 = vmax.f32 %v2070, 0.0
        %v2150 = vmax.f32 %v1959, 0.0
        %v2151 = vmax.f32 %v1961, 0.0
        %v2152 = vmax.f32 %v2072, 0.0
        %v2153 = vmax.f32 %v2074, 0.0
        %v2154 = vmax.f32 %v1965, 0.0
        %v2155 = vmax.f32 %v1967, 0.0
        %v2156 = vmax.f32 %v2078, 0.0
        %v2157 = vmax.f32 %v2080, 0.0
        %v2158 = vmax.f32 %v1969, 0.0
        %v2159 = vmax.f32 %v1971, 0.0
        %v2160 = vmax.f32 %v2082, 0.0
        %v2161 = vmax.f32 %v2084, 0.0
        %v2162 = vmax.f32 %v1975, 0.0
        %v2163 = vmax.f32 %v1977, 0.0
        %v2164 = vmax.f32 %v2088, 0.0
        %v2165 = vmax.f32 %v2090, 0.0
        %v2166 = vmax.f32 %v1979, 0.0
        %v2167 = vmax.f32 %v1981, 0.0
        %v2168 = vmax.f32 %v2092, 0.0
        %v2169 = vmax.f32 %v2094, 0.0
        %v2170 = vmax.f32 %v1985, 0.0
        %v2171 = vmax.f32 %v1987, 0.0
        %v2172 = vmax.f32 %v2098, 0.0
        %v2173 = vmax.f32 %v2100, 0.0
        %v2174 = vmax.f32 %v1989, 0.0
        %v2175 = vmax.f32 %v1991, 0.0
        %v2176 = vmax.f32 %v2102, 0.0
        %v2177 = vmax.f32 %v2104, 0.0
        %v2178 = vmax.f32 %v1995, 0.0
        %v2179 = vmax.f32 %v1997, 0.0
        %v2180 = vmax.f32 %v2108, 0.0
        %v2181 = vmax.f32 %v2110, 0.0
        %v2182 = vmax.f32 %v1999, 0.0
        %v2183 = vmax.f32 %v2001, 0.0
        %v2184 = vmax.f32 %v2112, 0.0
        %v2185 = vmax.f32 %v2114, 0.0
        %v2186 = vmax.f32 %v2005, 0.0
        %v2187 = vmax.f32 %v2007, 0.0
        %v2188 = vmax.f32 %v2118, 0.0
        %v2189 = vmax.f32 %v2120, 0.0
        %v2190 = vmax.f32 %v2009, 0.0
        %v2191 = vmax.f32 %v2011, 0.0
        %v2192 = vmax.f32 %v2122, 0.0
        %v2193 = vmax.f32 %v2124, 0.0
        %v2194 = vmax.f32 %v2015, 0.0
        %v2195 = vmax.f32 %v2017, 0.0
        %v2196 = vmax.f32 %v2128, 0.0
        %v2197 = vmax.f32 %v2130, 0.0
        %v2198 = vmax.f32 %v2019, 0.0
        %v2199 = vmax.f32 %v2021, 0.0
        %v2200 = vmax.f32 %v2132, 0.0
        %v2201 = vmax.f32 %v2134, 0.0
        %v2202 = vmax.f32 %v2025, 0.0
        %v2203 = vmax.f32 %v2027, 0.0
        %v2204 = vmax.f32 %v2138, 0.0
        %v2205 = vmax.f32 %v2140, 0.0
        %v2206 = vmax.f32 %v2029, 0.0
        %v2207 = vmax.f32 %v2031, 0.0
        %v2208 = vmax.f32 %v2142, 0.0
        %v2209 = vmax.f32 %v2144, 0.0
        %v2210 = vpack.c.bf16 %v2150, %v2146
        %v2211 = vpack.c.bf16 %v2151, %v2147
        %v2212 = vpack.c.bf16 %v2152, %v2148
        %v2213 = vpack.c.bf16 %v2153, %v2149
        %v2214 = vpack.c.bf16 %v2158, %v2154
        %v2215 = vpack.c.bf16 %v2159, %v2155
        %v2216 = vpack.c.bf16 %v2160, %v2156
        %v2217 = vpack.c.bf16 %v2161, %v2157
        %v2218 = vpack.c.bf16 %v2166, %v2162
        %v2219 = vpack.c.bf16 %v2167, %v2163
        %v2220 = vpack.c.bf16 %v2168, %v2164
        %v2221 = vpack.c.bf16 %v2169, %v2165
        %v2222 = vpack.c.bf16 %v2174, %v2170
        %v2223 = vpack.c.bf16 %v2175, %v2171
        %v2224 = vpack.c.bf16 %v2176, %v2172
        %v2225 = vpack.c.bf16 %v2177, %v2173
        %v2226 = vpack.c.bf16 %v2182, %v2178
        %v2227 = vpack.c.bf16 %v2183, %v2179
        %v2228 = vpack.c.bf16 %v2184, %v2180
        %v2229 = vpack.c.bf16 %v2185, %v2181
        %v2230 = vpack.c.bf16 %v2190, %v2186
        %v2231 = vpack.c.bf16 %v2191, %v2187
        %v2232 = vpack.c.bf16 %v2192, %v2188
        %v2233 = vpack.c.bf16 %v2193, %v2189
        %v2234 = vpack.c.bf16 %v2198, %v2194
        %v2235 = vpack.c.bf16 %v2199, %v2195
        %v2236 = vpack.c.bf16 %v2200, %v2196
        %v2237 = vpack.c.bf16 %v2201, %v2197
        %v2238 = vpack.c.bf16 %v2206, %v2202
        %v2239 = vpack.c.bf16 %v2207, %v2203
        %v2240 = vpack.c.bf16 %v2208, %v2204
        %v2241 = vpack.c.bf16 %v2209, %v2205
        %2242 = vmatprep.subr.bf16.mxu0 %v2211
        %2243 = vmatpush1.bf16.msra.mxu0 %v2210
        %2244 = vmatprep.subr.bf16.mxu0 %v2215
        %2245 = vmatpush1.bf16.msra.mxu0 %v2214
        %2246 = vmatprep.subr.bf16.mxu0 %v2219
        %2247 = vmatpush1.bf16.msra.mxu0 %v2218
        %2248 = vmatprep.subr.bf16.mxu0 %v2223
        %2249 = vmatpush1.bf16.msra.mxu0 %v2222
        %2250 = vmatprep.subr.bf16.mxu0 %v2227
        %2251 = vmatpush1.bf16.msra.mxu0 %v2226
        %2252 = vmatprep.subr.bf16.mxu0 %v2231
        %2253 = vmatpush1.bf16.msra.mxu0 %v2230
        %2254 = vmatprep.subr.bf16.mxu0 %v2235
        %2255 = vmatpush1.bf16.msra.mxu0 %v2234
        %2256 = vmatprep.subr.bf16.mxu0 %v2239
        %2257 = vmatpush1.bf16.msra.mxu0 %v2238
        %2258 = vmatprep.subr.bf16.mxu0 0
        %2259 = vmatpush1.bf16.msra.mxu0 0
        %2260 = vmatprep.subr.bf16.mxu0 0
        %2261 = vmatpush1.bf16.msra.mxu0 0
        %2262 = vmatprep.subr.bf16.mxu0 0
        %2263 = vmatpush1.bf16.msra.mxu0 0
        %2264 = vmatprep.subr.bf16.mxu0 0
        %2265 = vmatpush1.bf16.msra.mxu0 0
        %2266 = vmatprep.subr.bf16.mxu0 0
        %2267 = vmatpush1.bf16.msra.mxu0 0
        %2268 = vmatprep.subr.bf16.mxu0 0
        %2269 = vmatpush1.bf16.msra.mxu0 0
        %2270 = vmatprep.subr.bf16.mxu0 0
        %2271 = vmatpush1.bf16.msra.mxu0 0
        %2272 = vmatprep.subr.bf16.mxu0 0
        %2273 = vmatpush1.bf16.msra.mxu0 0
        %2274 = vmatprep.mubr.bf16.mxu0 0
        %2275 = vmatmul.mubr.bf16.gmra.mrb[0].mxu0 %v1253
        %v2276 = vpop.f32.mrb[0].mxu0
        %v2277 = vadd.f32 %v1200, %v2276
        %v2278 = vpop.f32.mrb[0].mxu0
        %v2279 = vadd.f32 %v1200, %v2278
        %v2280 = vpop.f32.mrb[0].mxu0
        %v2281 = vadd.f32 %v1205, %v2280
        %v2282 = vpop.f32.mrb[0].mxu0
        %v2283 = vadd.f32 %v1205, %v2282
        %2284 = vmatprep.mubr.bf16.mxu0 0
        %2285 = vmatmul.mubr.bf16.gmra.mrb[0].mxu0 %v1254
        %v2286 = vpop.f32.mrb[0].mxu0
        %v2287 = vadd.f32 %v1210, %v2286
        %v2288 = vpop.f32.mrb[0].mxu0
        %v2289 = vadd.f32 %v1210, %v2288
        %v2290 = vpop.f32.mrb[0].mxu0
        %v2291 = vadd.f32 %v1215, %v2290
        %v2292 = vpop.f32.mrb[0].mxu0
        %v2293 = vadd.f32 %v1215, %v2292
        %2294 = vmatprep.mubr.bf16.mxu0 0
        %2295 = vmatmul.mubr.bf16.gmra.mrb[0].mxu0 %v1255
        %v2296 = vpop.f32.mrb[0].mxu0
        %v2297 = vadd.f32 %v1220, %v2296
        %v2298 = vpop.f32.mrb[0].mxu0
        %v2299 = vadd.f32 %v1220, %v2298
        %v2300 = vpop.f32.mrb[0].mxu0
        %v2301 = vadd.f32 %v1225, %v2300
        %v2302 = vpop.f32.mrb[0].mxu0
        %v2303 = vadd.f32 %v1225, %v2302
        %2304 = vmatprep.mubr.bf16.mxu0 0
        %2305 = vmatmul.mubr.bf16.gmra.mrb[0].mxu0 %v1256
        %v2306 = vpop.f32.mrb[0].mxu0
        %v2307 = vadd.f32 %v1230, %v2306
        %v2308 = vpop.f32.mrb[0].mxu0
        %v2309 = vadd.f32 %v1230, %v2308
        %v2310 = vpop.f32.mrb[0].mxu0
        %v2311 = vadd.f32 %v1235, %v2310
        %v2312 = vpop.f32.mrb[0].mxu0
        %v2313 = vadd.f32 %v1235, %v2312
        %2314 = vdwg.mxu0
        %2315 = vmatprep.subr.bf16.mxu0 %v2213
        %2316 = vmatpush1.bf16.msra.mxu0 %v2212
        %2317 = vmatprep.subr.bf16.mxu0 %v2217
        %2318 = vmatpush1.bf16.msra.mxu0 %v2216
        %2319 = vmatprep.subr.bf16.mxu0 %v2221
        %2320 = vmatpush1.bf16.msra.mxu0 %v2220
        %2321 = vmatprep.subr.bf16.mxu0 %v2225
        %2322 = vmatpush1.bf16.msra.mxu0 %v2224
        %2323 = vmatprep.subr.bf16.mxu0 %v2229
        %2324 = vmatpush1.bf16.msra.mxu0 %v2228
        %2325 = vmatprep.subr.bf16.mxu0 %v2233
        %2326 = vmatpush1.bf16.msra.mxu0 %v2232
        %2327 = vmatprep.subr.bf16.mxu0 %v2237
        %2328 = vmatpush1.bf16.msra.mxu0 %v2236
        %2329 = vmatprep.subr.bf16.mxu0 %v2241
        %2330 = vmatpush1.bf16.msra.mxu0 %v2240
        %2331 = vmatprep.subr.bf16.mxu0 0
        %2332 = vmatpush1.bf16.msra.mxu0 0
        %2333 = vmatprep.subr.bf16.mxu0 0
        %2334 = vmatpush1.bf16.msra.mxu0 0
        %2335 = vmatprep.subr.bf16.mxu0 0
        %2336 = vmatpush1.bf16.msra.mxu0 0
        %2337 = vmatprep.subr.bf16.mxu0 0
        %2338 = vmatpush1.bf16.msra.mxu0 0
        %2339 = vmatprep.subr.bf16.mxu0 0
        %2340 = vmatpush1.bf16.msra.mxu0 0
        %2341 = vmatprep.subr.bf16.mxu0 0
        %2342 = vmatpush1.bf16.msra.mxu0 0
        %2343 = vmatprep.subr.bf16.mxu0 0
        %2344 = vmatpush1.bf16.msra.mxu0 0
        %2345 = vmatprep.subr.bf16.mxu0 0
        %2346 = vmatpush1.bf16.msra.mxu0 0
        %2347 = vmatprep.mubr.bf16.mxu0 0
        %2348 = vmatmul.mubr.bf16.gmra.mrb[0].mxu0 %v1253
        %v2349 = vpop.f32.mrb[0].mxu0
        %v2350 = vadd.f32 %v1200, %v2349
        %v2351 = vpop.f32.mrb[0].mxu0
        %v2352 = vadd.f32 %v1200, %v2351
        %v2353 = vpop.f32.mrb[0].mxu0
        %v2354 = vadd.f32 %v1205, %v2353
        %v2355 = vpop.f32.mrb[0].mxu0
        %v2356 = vadd.f32 %v1205, %v2355
        %2357 = vmatprep.mubr.bf16.mxu0 0
        %2358 = vmatmul.mubr.bf16.gmra.mrb[0].mxu0 %v1254
        %v2359 = vpop.f32.mrb[0].mxu0
        %v2360 = vadd.f32 %v1210, %v2359
        %v2361 = vpop.f32.mrb[0].mxu0
        %v2362 = vadd.f32 %v1210, %v2361
        %v2363 = vpop.f32.mrb[0].mxu0
        %v2364 = vadd.f32 %v1215, %v2363
        %v2365 = vpop.f32.mrb[0].mxu0
        %v2366 = vadd.f32 %v1215, %v2365
        %2367 = vmatprep.mubr.bf16.mxu0 0
        %2368 = vmatmul.mubr.bf16.gmra.mrb[0].mxu0 %v1255
        %v2369 = vpop.f32.mrb[0].mxu0
        %v2370 = vadd.f32 %v1220, %v2369
        %v2371 = vpop.f32.mrb[0].mxu0
        %v2372 = vadd.f32 %v1220, %v2371
        %v2373 = vpop.f32.mrb[0].mxu0
        %v2374 = vadd.f32 %v1225, %v2373
        %v2375 = vpop.f32.mrb[0].mxu0
        %v2376 = vadd.f32 %v1225, %v2375
        %2377 = vmatprep.mubr.bf16.mxu0 0
        %2378 = vmatmul.mubr.bf16.gmra.mrb[0].mxu0 %v1256
        %v2379 = vpop.f32.mrb[0].mxu0
        %v2380 = vadd.f32 %v1230, %v2379
        %v2381 = vpop.f32.mrb[0].mxu0
        %v2382 = vadd.f32 %v1230, %v2381
        %v2383 = vpop.f32.mrb[0].mxu0
        %v2384 = vadd.f32 %v1235, %v2383
        %v2385 = vpop.f32.mrb[0].mxu0
        %v2386 = vadd.f32 %v1235, %v2385
        %2387 = vdwg.mxu0
        %v2388 = vmax.f32 %v2277, 0.0
        %v2389 = vmax.f32 %v2279, 0.0
        %v2390 = vmax.f32 %v2350, 0.0
        %v2391 = vmax.f32 %v2352, 0.0
        %v2392 = vmax.f32 %v2281, 0.0
        %v2393 = vmax.f32 %v2283, 0.0
        %v2394 = vmax.f32 %v2354, 0.0
        %v2395 = vmax.f32 %v2356, 0.0
        %v2396 = vmax.f32 %v2287, 0.0
        %v2397 = vmax.f32 %v2289, 0.0
        %v2398 = vmax.f32 %v2360, 0.0
        %v2399 = vmax.f32 %v2362, 0.0
        %v2400 = vmax.f32 %v2291, 0.0
        %v2401 = vmax.f32 %v2293, 0.0
        %v2402 = vmax.f32 %v2364, 0.0
        %v2403 = vmax.f32 %v2366, 0.0
        %v2404 = vmax.f32 %v2297, 0.0
        %v2405 = vmax.f32 %v2299, 0.0
        %v2406 = vmax.f32 %v2370, 0.0
        %v2407 = vmax.f32 %v2372, 0.0
        %v2408 = vmax.f32 %v2301, 0.0
        %v2409 = vmax.f32 %v2303, 0.0
        %v2410 = vmax.f32 %v2374, 0.0
        %v2411 = vmax.f32 %v2376, 0.0
        %v2412 = vmax.f32 %v2307, 0.0
        %v2413 = vmax.f32 %v2309, 0.0
        %v2414 = vmax.f32 %v2380, 0.0
        %v2415 = vmax.f32 %v2382, 0.0
        %v2416 = vmax.f32 %v2311, 0.0
        %v2417 = vmax.f32 %v2313, 0.0
        %v2418 = vmax.f32 %v2384, 0.0
        %v2419 = vmax.f32 %v2386, 0.0
        %v2420 = vpack.c.bf16 %v2392, %v2388
        %v2421 = vpack.c.bf16 %v2393, %v2389
        %v2422 = vpack.c.bf16 %v2394, %v2390
        %v2423 = vpack.c.bf16 %v2395, %v2391
        %v2424 = vpack.c.bf16 %v2400, %v2396
        %v2425 = vpack.c.bf16 %v2401, %v2397
        %v2426 = vpack.c.bf16 %v2402, %v2398
        %v2427 = vpack.c.bf16 %v2403, %v2399
        %v2428 = vpack.c.bf16 %v2408, %v2404
        %v2429 = vpack.c.bf16 %v2409, %v2405
        %v2430 = vpack.c.bf16 %v2410, %v2406
        %v2431 = vpack.c.bf16 %v2411, %v2407
        %v2432 = vpack.c.bf16 %v2416, %v2412
        %v2433 = vpack.c.bf16 %v2417, %v2413
        %v2434 = vpack.c.bf16 %v2418, %v2414
        %v2435 = vpack.c.bf16 %v2419, %v2415
        %2436 = vmatprep.subr.bf16.mxu0 %v2421
        %2437 = vmatpush1.bf16.msra.mxu0 %v2420
        %2438 = vmatprep.subr.bf16.mxu0 %v2425
        %2439 = vmatpush1.bf16.msra.mxu0 %v2424
        %2440 = vmatprep.subr.bf16.mxu0 %v2429
        %2441 = vmatpush1.bf16.msra.mxu0 %v2428
        %2442 = vmatprep.subr.bf16.mxu0 %v2433
        %2443 = vmatpush1.bf16.msra.mxu0 %v2432
        %2444 = vmatprep.subr.bf16.mxu0 0
        %2445 = vmatpush1.bf16.msra.mxu0 0
        %2446 = vmatprep.subr.bf16.mxu0 0
        %2447 = vmatpush1.bf16.msra.mxu0 0
        %2448 = vmatprep.subr.bf16.mxu0 0
        %2449 = vmatpush1.bf16.msra.mxu0 0
        %2450 = vmatprep.subr.bf16.mxu0 0
        %2451 = vmatpush1.bf16.msra.mxu0 0
        %2452 = vmatprep.subr.bf16.mxu0 0
        %2453 = vmatpush1.bf16.msra.mxu0 0
        %2454 = vmatprep.subr.bf16.mxu0 0
        %2455 = vmatpush1.bf16.msra.mxu0 0
        %2456 = vmatprep.subr.bf16.mxu0 0
        %2457 = vmatpush1.bf16.msra.mxu0 0
        %2458 = vmatprep.subr.bf16.mxu0 0
        %2459 = vmatpush1.bf16.msra.mxu0 0
        %2460 = vmatprep.subr.bf16.mxu0 0
        %2461 = vmatpush1.bf16.msra.mxu0 0
        %2462 = vmatprep.subr.bf16.mxu0 0
        %2463 = vmatpush1.bf16.msra.mxu0 0
        %2464 = vmatprep.subr.bf16.mxu0 0
        %2465 = vmatpush1.bf16.msra.mxu0 0
        %2466 = vmatprep.subr.bf16.mxu0 0
        %2467 = vmatpush1.bf16.msra.mxu0 0
        %2468 = vmatprep.mubr.bf16.mxu0 0
        %2469 = vmatmul.mubr.bf16.gmra.mrb[0].mxu0 %v1487
        %v2470 = vpop.f32.mrb[0].mxu0
        %v2471 = vadd.f32 %v1458, %v2470
        %v2472 = vpop.f32.mrb[0].mxu0
        %v2473 = vadd.f32 %v1458, %v2472
        %v2474 = vpop.f32.mrb[0].mxu0
        %v2475 = vadd.f32 %v1463, %v2474
        %v2476 = vpop.f32.mrb[0].mxu0
        %v2477 = vadd.f32 %v1463, %v2476
        %2478 = vmatprep.mubr.bf16.mxu0 0
        %2479 = vmatmul.mubr.bf16.gmra.mrb[0].mxu0 %v1490
        %v2480 = vpop.f32.mrb[0].mxu0
        %v2481 = vadd.f32 %v1468, %v2480
        %v2482 = vpop.f32.mrb[0].mxu0
        %v2483 = vadd.f32 %v1468, %v2482
        %v2484 = vpop.f32.mrb[0].mxu0
        %v2485 = vadd.f32 %v1473, %v2484
        %v2486 = vpop.f32.mrb[0].mxu0
        %v2487 = vadd.f32 %v1473, %v2486
        %2488 = vdwg.mxu0
        %2489 = vmatprep.subr.bf16.mxu0 %v2423
        %2490 = vmatpush1.bf16.msra.mxu0 %v2422
        %2491 = vmatprep.subr.bf16.mxu0 %v2427
        %2492 = vmatpush1.bf16.msra.mxu0 %v2426
        %2493 = vmatprep.subr.bf16.mxu0 %v2431
        %2494 = vmatpush1.bf16.msra.mxu0 %v2430
        %2495 = vmatprep.subr.bf16.mxu0 %v2435
        %2496 = vmatpush1.bf16.msra.mxu0 %v2434
        %2497 = vmatprep.subr.bf16.mxu0 0
        %2498 = vmatpush1.bf16.msra.mxu0 0
        %2499 = vmatprep.subr.bf16.mxu0 0
        %2500 = vmatpush1.bf16.msra.mxu0 0
        %2501 = vmatprep.subr.bf16.mxu0 0
        %2502 = vmatpush1.bf16.msra.mxu0 0
        %2503 = vmatprep.subr.bf16.mxu0 0
        %2504 = vmatpush1.bf16.msra.mxu0 0
        %2505 = vmatprep.subr.bf16.mxu0 0
        %2506 = vmatpush1.bf16.msra.mxu0 0
        %2507 = vmatprep.subr.bf16.mxu0 0
        %2508 = vmatpush1.bf16.msra.mxu0 0
        %2509 = vmatprep.subr.bf16.mxu0 0
        %2510 = vmatpush1.bf16.msra.mxu0 0
        %2511 = vmatprep.subr.bf16.mxu0 0
        %2512 = vmatpush1.bf16.msra.mxu0 0
        %2513 = vmatprep.subr.bf16.mxu0 0
        %2514 = vmatpush1.bf16.msra.mxu0 0
        %2515 = vmatprep.subr.bf16.mxu0 0
        %2516 = vmatpush1.bf16.msra.mxu0 0
        %2517 = vmatprep.subr.bf16.mxu0 0
        %2518 = vmatpush1.bf16.msra.mxu0 0
        %2519 = vmatprep.subr.bf16.mxu0 0
        %2520 = vmatpush1.bf16.msra.mxu0 0
        %2521 = vmatprep.mubr.bf16.mxu0 0
        %2522 = vmatmul.mubr.bf16.gmra.mrb[0].mxu0 %v1487
        %v2523 = vpop.f32.mrb[0].mxu0
        %v2524 = vadd.f32 %v1458, %v2523
        %v2525 = vpop.f32.mrb[0].mxu0
        %v2526 = vadd.f32 %v1458, %v2525
        %v2527 = vpop.f32.mrb[0].mxu0
        %v2528 = vadd.f32 %v1463, %v2527
        %v2529 = vpop.f32.mrb[0].mxu0
        %v2530 = vadd.f32 %v1463, %v2529
        %2531 = vmatprep.mubr.bf16.mxu0 0
        %2532 = vmatmul.mubr.bf16.gmra.mrb[0].mxu0 %v1490
        %v2533 = vpop.f32.mrb[0].mxu0
        %v2534 = vadd.f32 %v1468, %v2533
        %v2535 = vpop.f32.mrb[0].mxu0
        %v2536 = vadd.f32 %v1468, %v2535
        %v2537 = vpop.f32.mrb[0].mxu0
        %v2538 = vadd.f32 %v1473, %v2537
        %v2539 = vpop.f32.mrb[0].mxu0
        %v2540 = vadd.f32 %v1473, %v2539
        %2541 = vdwg.mxu0
        %v2542 = vmax.f32 %v2471, 0.0
        %v2543 = vmax.f32 %v2473, 0.0
        %v2544 = vmax.f32 %v2524, 0.0
        %v2545 = vmax.f32 %v2526, 0.0
        %v2546 = vmax.f32 %v2475, 0.0
        %v2547 = vmax.f32 %v2477, 0.0
        %v2548 = vmax.f32 %v2528, 0.0
        %v2549 = vmax.f32 %v2530, 0.0
        %v2550 = vmax.f32 %v2481, 0.0
        %v2551 = vmax.f32 %v2483, 0.0
        %v2552 = vmax.f32 %v2534, 0.0
        %v2553 = vmax.f32 %v2536, 0.0
        %v2554 = vmax.f32 %v2485, 0.0
        %v2555 = vmax.f32 %v2487, 0.0
        %v2556 = vmax.f32 %v2538, 0.0
        %v2557 = vmax.f32 %v2540, 0.0
        %v2558 = vpack.c.bf16 %v2546, %v2542
        %v2559 = vpack.c.bf16 %v2547, %v2543
        %v2560 = vpack.c.bf16 %v2548, %v2544
        %v2561 = vpack.c.bf16 %v2549, %v2545
        %v2562 = vpack.c.bf16 %v2554, %v2550
        %v2563 = vpack.c.bf16 %v2555, %v2551
        %v2564 = vpack.c.bf16 %v2556, %v2552
        %v2565 = vpack.c.bf16 %v2557, %v2553
        %2566 = vmatprep.subr.bf16.mxu0 %v2559
        %2567 = vmatpush1.bf16.msra.mxu0 %v2558
        %2568 = vmatprep.subr.bf16.mxu0 %v2563
        %2569 = vmatpush1.bf16.msra.mxu0 %v2562
        %2570 = vmatprep.subr.bf16.mxu0 0
        %2571 = vmatpush1.bf16.msra.mxu0 0
        %2572 = vmatprep.subr.bf16.mxu0 0
        %2573 = vmatpush1.bf16.msra.mxu0 0
        %2574 = vmatprep.subr.bf16.mxu0 0
        %2575 = vmatpush1.bf16.msra.mxu0 0
        %2576 = vmatprep.subr.bf16.mxu0 0
        %2577 = vmatpush1.bf16.msra.mxu0 0
        %2578 = vmatprep.subr.bf16.mxu0 0
        %2579 = vmatpush1.bf16.msra.mxu0 0
        %2580 = vmatprep.subr.bf16.mxu0 0
        %2581 = vmatpush1.bf16.msra.mxu0 0
        %2582 = vmatprep.subr.bf16.mxu0 0
        %2583 = vmatpush1.bf16.msra.mxu0 0
        %2584 = vmatprep.subr.bf16.mxu0 0
        %2585 = vmatpush1.bf16.msra.mxu0 0
        %2586 = vmatprep.subr.bf16.mxu0 0
        %2587 = vmatpush1.bf16.msra.mxu0 0
        %2588 = vmatprep.subr.bf16.mxu0 0
        %2589 = vmatpush1.bf16.msra.mxu0 0
        %2590 = vmatprep.subr.bf16.mxu0 0
        %2591 = vmatpush1.bf16.msra.mxu0 0
        %2592 = vmatprep.subr.bf16.mxu0 0
        %2593 = vmatpush1.bf16.msra.mxu0 0
        %2594 = vmatprep.subr.bf16.mxu0 0
        %2595 = vmatpush1.bf16.msra.mxu0 0
        %2596 = vmatprep.subr.bf16.mxu0 0
        %2597 = vmatpush1.bf16.msra.mxu0 0
        %2598 = vmatprep.mubr.bf16.mxu0 0
        %2599 = vmatmul.mubr.bf16.gmra.mrb[0].mxu0 %v1629
        %v2600 = vpop.f32.mrb[0].mxu0
        %v2601 = vadd.f32 %v1625, %v2600
        %v2602 = vpop.f32.mrb[0].mxu0
        %v2603 = vadd.f32 %v1625, %v2602
        %v2604 = vpop.f32.mrb[0].mxu0
        %v2605 = vpop.f32.mrb[0].mxu0
        %2606 = vdwg.mxu0
        %2607 = vmatprep.subr.bf16.mxu0 %v2561
        %2608 = vmatpush1.bf16.msra.mxu0 %v2560
        %2609 = vmatprep.subr.bf16.mxu0 %v2565
        %2610 = vmatpush1.bf16.msra.mxu0 %v2564
        %2611 = vmatprep.subr.bf16.mxu0 0
        %2612 = vmatpush1.bf16.msra.mxu0 0
        %2613 = vmatprep.subr.bf16.mxu0 0
        %2614 = vmatpush1.bf16.msra.mxu0 0
        %2615 = vmatprep.subr.bf16.mxu0 0
        %2616 = vmatpush1.bf16.msra.mxu0 0
        %2617 = vmatprep.subr.bf16.mxu0 0
        %2618 = vmatpush1.bf16.msra.mxu0 0
        %2619 = vmatprep.subr.bf16.mxu0 0
        %2620 = vmatpush1.bf16.msra.mxu0 0
        %2621 = vmatprep.subr.bf16.mxu0 0
        %2622 = vmatpush1.bf16.msra.mxu0 0
        %2623 = vmatprep.subr.bf16.mxu0 0
        %2624 = vmatpush1.bf16.msra.mxu0 0
        %2625 = vmatprep.subr.bf16.mxu0 0
        %2626 = vmatpush1.bf16.msra.mxu0 0
        %2627 = vmatprep.subr.bf16.mxu0 0
        %2628 = vmatpush1.bf16.msra.mxu0 0
        %2629 = vmatprep.subr.bf16.mxu0 0
        %2630 = vmatpush1.bf16.msra.mxu0 0
        %2631 = vmatprep.subr.bf16.mxu0 0
        %2632 = vmatpush1.bf16.msra.mxu0 0
        %2633 = vmatprep.subr.bf16.mxu0 0
        %2634 = vmatpush1.bf16.msra.mxu0 0
        %2635 = vmatprep.subr.bf16.mxu0 0
        %2636 = vmatpush1.bf16.msra.mxu0 0
        %2637 = vmatprep.subr.bf16.mxu0 0
        %2638 = vmatpush1.bf16.msra.mxu0 0
        %2639 = vmatprep.mubr.bf16.mxu0 0
        %2640 = vmatmul.mubr.bf16.gmra.mrb[0].mxu0 %v1629
        %v2641 = vpop.f32.mrb[0].mxu0
        %v2642 = vadd.f32 %v1625, %v2641
        %v2643 = vpop.f32.mrb[0].mxu0
        %v2644 = vadd.f32 %v1625, %v2643
        %v2645 = vpop.f32.mrb[0].mxu0
        %v2646 = vpop.f32.mrb[0].mxu0
        %2647 = vdwg.mxu0
        %v2648 = vtanh.pop %v2601
        %v2649 = vtanh.pop %v2603
        %v2650 = vtanh.pop %v2642
        %v2651 = vtanh.pop %v2644
        %v2656 = vcombine.low %v2648, %v2649
        %v2657 = vcombine.low %v2650, %v2651
        %s2660 = scalar_lea.vmem %s491, 16 [#allocation3]
        %2661 = vst [vmem:[%s2660] sm:$0x77] %v2656
        %2662 = vst [vmem:[%s2660 + $0x8] sm:$0x77] %v2657
        %s2663 = sand.u32 %s238, 1
        %s2664 = sand.u32 %s238, 1
        %s2665 = smul.addr %s2664, 32
        %s2666 = scalar_lea.vmem [#allocation3], %s2665
        // Predicated region
        $region80: #{pointgencon_forward.1} parent=74 // pred_check
          %p2667 = pneg %p248
        $region81: #{pointgencon_forward.1} parent=74 // pred_check_branch
          %2669 = sbr.rel (%p2667) target = $region83
        $region82: #{pointgencon_forward.1} parent=74 // pred_region
          %s2670 = smul.u32 2, %s24
          %s2671 = smul.u32 4, %s25
          %s2672 = smul.addr %s2670, 8
          %s2673 = sadd.s32 %s2671, %s2672
          %s2674 = smul.addr %s2673, 4
          %s2675 = scalar_lea.vmem %s9, %s2674
          // Predicated region
          $region84: #{pointgencon_forward.1} parent=82 // pred_check
            _
          $region85: #{pointgencon_forward.1} parent=82 // pred_check_branch
            %2677 = sbr.rel (0) target = $region87
          $region86: #{pointgencon_forward.1} parent=82 // pred_region
            // Predicated region
            $region88: #{pointgencon_forward.1} parent=86 // pred_check
              _
            $region89: #{pointgencon_forward.1} parent=86 // pred_check_branch
              %2679 = sbr.rel (0) target = $region91
            $region90: #{pointgencon_forward.1} parent=86 // pred_region
              loop: start=0, step=1, limit=1
              $region92: #{pointgencon_forward.1} parent=90 // loop_pre_header
                _
              $region93: #{pointgencon_forward.1} parent=90 // loop_header
                %s2681 = sphi 0, %s2685
                %p2682 = scmp.ge.s32.totalorder %s2681, 1
                %s2686 = sphi %s2666, %s2666
                %s2687 = sphi %s2675, %s2675
              $region94: #{pointgencon_forward.1} parent=90 // loop_header_branch
                %2684 = sbr.rel (%p2682) target = $region98
              $region95: #{pointgencon_forward.1} parent=90 // loop_body
                %v2688 = vld [vmem:[%s2686] sm:$0xff]
                %2689 = vst [vmem:[%s2687] sm:$0xff] %v2688
                %v2690 = vld [vmem:[%s2686 + $0x8] sm:$0xff]
                %2691 = vst [vmem:[%s2687 + $0x8] sm:$0xff] %v2690
                %v2692 = vld [vmem:[%s2686 + $0x10] sm:$0xff]
                %2693 = vst [vmem:[%s2687 + $0x20] sm:$0xff] %v2692
                %v2694 = vld [vmem:[%s2686 + $0x18] sm:$0xff]
                %2695 = vst [vmem:[%s2687 + $0x28] sm:$0xff] %v2694
              $region96: #{pointgencon_forward.1} parent=90 // loop_footer
                %s2685 = sadd.s32 1, %s2681
              $region97: #{pointgencon_forward.1} parent=90 // loop_footer_branch
                %2680 = sbr.rel target = $region93
              $region98: #{pointgencon_forward.1} parent=90 // loop_exit
                _
            $region91: #{pointgencon_forward.1} parent=86 // pred_fallthru
              _
            // Predicated region
            $region99: #{pointgencon_forward.1} parent=86 // pred_check
              _
            $region100: #{pointgencon_forward.1} parent=86 // pred_check_branch
              %2697 = sbr.rel target = $region102
            $region101: #{pointgencon_forward.1} parent=86 // pred_region
              _
            $region102: #{pointgencon_forward.1} parent=86 // pred_fallthru
              _
          $region87: #{pointgencon_forward.1} parent=82 // pred_fallthru
            _
          %2698 = vnop
        $region83: #{pointgencon_forward.1} parent=74 // pred_fallthru
          _
      $region75: #{pointgencon_forward.1} parent=5 // pred_fallthru
        _
      %p2699 = scmp.le.s32.totalorder 2, %s15
      // Predicated region
      $region103: #{pointgencon_forward.1} parent=5 // pred_check
        %p2700 = pneg %p2699
      $region104: #{pointgencon_forward.1} parent=5 // pred_check_branch
        %2702 = sbr.rel (%p2700) target = $region106
      $region105: #{pointgencon_forward.1} parent=5 // pred_region
        %s2703 = ssub.s32 %s15, 2
        // Predicated region
        $region107: #{pointgencon_forward.1} parent=105 // pred_check
          %p2704 = pneg %p254
        $region108: #{pointgencon_forward.1} parent=105 // pred_check_branch
          %2706 = sbr.rel (%p2704) target = $region110
        $region109: #{pointgencon_forward.1} parent=105 // pred_region
          %s2707 = sand.u32 %s239, 1
          %s2708 = sand.u32 %s239, 1
          %s2709 = smul.addr %s2708, 32
          %s2710 = scalar_lea.vmem [#allocation3], %s2709
        $region110: #{pointgencon_forward.1} parent=105 // pred_fallthru
          _
      $region106: #{pointgencon_forward.1} parent=5 // pred_fallthru
        _
    $region6: #{pointgencon_forward.1} parent=1 // loop_footer
      %s19 = sadd.s32 1, %s15
    $region7: #{pointgencon_forward.1} parent=1 // loop_footer_branch
      %14 = sbr.rel target = $region3
    $region8: #{pointgencon_forward.1} parent=1 // loop_exit
      _

</llo_original>
